<compile_context>
chip_gen: v6e
topology: v6e:2x2x1
jax: 0.10.0
libtpu: 0.0.40
codegen_flags: <defaults>
</compile_context>

<pallas_src>
import functools
import math

import jax
import jax.numpy as jnp
from jax import lax
from jax.experimental import pallas as pl
from jax.experimental.pallas import tpu as pltpu


def mha_kernel(xq_ref, xk_ref, xv_ref,
               wq_ref, bq_ref, wk_ref, bk_ref, wv_ref, bv_ref, wo_ref, bo_ref,
               out_ref, ctx_ref, *, h, d_k, scale):
    # Per-grid-step views:
    #   xq_ref : (1, tq, D)   query tile
    #   xk/xv  : (1, S,  D)   full key/value sequence
    #   w*_ref : (D, D)       pre-transposed Linear weights (in, out)
    #   b*_ref : (1, D)
    #   ctx_ref: (tq, D)      VMEM scratch holding the concatenated head outputs
    xq = xq_ref[0]                      # (tq, D)
    xk = xk_ref[0]                      # (S,  D)
    xv = xv_ref[0]

    # Input projections (Linear 0..2) -- full-D contractions, lane-dense,
    # f32 accumulation on the MXU.
    q = jnp.dot(xq, wq_ref[...], preferred_element_type=jnp.float32) + bq_ref[...]
    k = jnp.dot(xk, wk_ref[...], preferred_element_type=jnp.float32) + bk_ref[...]
    v = jnp.dot(xv, wv_ref[...], preferred_element_type=jnp.float32) + bv_ref[...]

    # Fold the 1/sqrt(d_k) softmax scale into q once (tq*D muls instead of
    # h*tq*S muls on the score tiles).
    q = q * scale

    # Contract the last dim of both operands: q_h @ k_h^T without forming k_h.T.
    dn_qk = (((1,), (1,)), ((), ()))

    # Per-head attention; each head's (tq, d_k) context is written into its
    # lane slice of the (tq, D) scratch so the output projection below is a
    # single full-depth matmul ( == concat(head_0..head_{h-1}) @ Wo ).
    for i in range(h):                  # static loop; h is small
        lo = i * d_k
        qh = q[:, lo:lo + d_k]          # (tq, d_k)
        kh = k[:, lo:lo + d_k]          # (S,  d_k)
        vh = v[:, lo:lo + d_k]

        s = lax.dot_general(qh, kh, dn_qk,
                            preferred_element_type=jnp.float32)     # (tq, S)
        s = s - jnp.max(s, axis=-1, keepdims=True)                   # stable softmax
        p = jnp.exp(s)
        p = p * pl.reciprocal(jnp.sum(p, axis=-1, keepdims=True), approx=True)

        ctx_ref[:, lo:lo + d_k] = jnp.dot(p.astype(vh.dtype), vh,
                                          preferred_element_type=jnp.float32)

    # Fused output projection (Linear 3): one (tq, D) @ (D, D) matmul, K = D.
    ctx = ctx_ref[...].astype(wo_ref.dtype)
    out = jnp.dot(ctx, wo_ref[...], preferred_element_type=jnp.float32) + bo_ref[...]
    out_ref[0] = out.astype(out_ref.dtype)


def mha_forward(xq, xk, xv, params, h, *, compute_dtype=None):
    """Multi-head attention forward (mask=None, eval mode).

    compute_dtype: optionally cast activations + weights (e.g. jnp.bfloat16)
    for the MXU; accumulation and softmax remain f32.  Output is f32.
    """
    B, S, D = xq.shape
    assert D % h == 0
    d_k = D // h
    wq, bq, wk, bk, wv, bv, wo, bo = params

    if compute_dtype is not None:
        cast = lambda a: a.astype(compute_dtype)
        xq, xk, xv = cast(xq), cast(xk), cast(xv)
        wq, wk, wv, wo = cast(wq), cast(wk), cast(wv), cast(wo)
        # biases stay f32 (added to f32 accumulators)

    # Query tiling: tq=128 when S is 128-aligned, else whole S (small shapes).
    tq = 128 if (S % 128 == 0) else S
    nq = S // tq

    xq_spec = pl.BlockSpec((1, tq, D), lambda b, qb: (b, qb, 0))
    kv_spec = pl.BlockSpec((1, S, D), lambda b, qb: (b, 0, 0))
    w_spec = pl.BlockSpec((D, D), lambda b, qb: (0, 0))
    b_spec = pl.BlockSpec((1, D), lambda b, qb: (0, 0))
    out_spec = pl.BlockSpec((1, tq, D), lambda b, qb: (b, qb, 0))

    return pl.pallas_call(
        functools.partial(mha_kernel, h=h, d_k=d_k, scale=1.0 / math.sqrt(d_k)),
        out_shape=jax.ShapeDtypeStruct((B, S, D), jnp.float32),
        grid=(B, nq),
        in_specs=[xq_spec, kv_spec, kv_spec,
                  w_spec, b_spec, w_spec, b_spec, w_spec, b_spec,
                  w_spec, b_spec],
        out_specs=out_spec,
        scratch_shapes=[pltpu.VMEM((tq, D), jnp.float32)],
        compiler_params=pltpu.CompilerParams(
            dimension_semantics=("parallel", "parallel")),
    )(xq, xk, xv, wq, bq, wk, bk, wv, bv, wo, bo)


def mha_reference(xq, xk, xv, params, h):
    """Plain-JAX reference mirroring the PyTorch forward (mask=None, eval)."""
    wq, bq, wk, bk, wv, bv, wo, bo = params
    B, S, D = xq.shape
    d_k = D // h

    def proj(x, w, b):
        y = x @ w + b                                           # (B, S, D)
        return y.reshape(B, S, h, d_k).transpose(0, 2, 1, 3)    # (B, h, S, d_k)

    q, k, v = proj(xq, wq, bq), proj(xk, wk, bk), proj(xv, wv, bv)
    scores = jnp.einsum("bhqd,bhkd->bhqk", q, k) / math.sqrt(d_k)
    p = jax.nn.softmax(scores, axis=-1)
    x = jnp.einsum("bhqk,bhkd->bhqd", p, v)
    x = x.transpose(0, 2, 1, 3).reshape(B, S, D)
    return x @ wo + bo


def make_params(key, d_model):
    """Deterministic Linear params (weights stored as (in, out))."""
    keys = jax.random.split(key, 8)
    bound = 1.0 / math.sqrt(d_model)
    def w(k): return jax.random.uniform(k, (d_model, d_model), jnp.float32, -bound, bound)
    def b(k): return jax.random.uniform(k, (1, d_model), jnp.float32, -bound, bound)
    return (w(keys[0]), b(keys[1]),   # Wq, bq
            w(keys[2]), b(keys[3]),   # Wk, bk
            w(keys[4]), b(keys[5]),   # Wv, bv
            w(keys[6]), b(keys[7]))   # Wo, bo


if __name__ == "__main__":
    B, S, d_model, h = 2, 8, 32, 4

    root = jax.random.PRNGKey(0)
    k_q, k_k, k_v, k_p = jax.random.split(root, 4)
    xq = jax.random.normal(k_q, (B, S, d_model), jnp.float32)
    xk = jax.random.normal(k_k, (B, S, d_model), jnp.float32)
    xv = jax.random.normal(k_v, (B, S, d_model), jnp.float32)
    params = make_params(k_p, d_model)

    out = mha_forward(xq, xk, xv, params, h)
    out = jax.block_until_ready(out)

    ref = mha_reference(xq, xk, xv, params, h)
    assert out.shape == (B, S, d_model)
    # Tolerance accounts for the EUP approximate reciprocal in the softmax.
    assert jnp.allclose(out, ref, atol=2e-3, rtol=2e-3), "mismatch vs reference"

    print("KERNEL_OK")
</pallas_src>

<mosaic_0001>
module attributes {stable_mosaic.version = 11 : i64} {
  func.func @mha_kernel(%arg0: i32, %arg1: i32, %arg2: memref<1x8x32xf32, #tpu.memory_space<vmem>>, %arg3: memref<1x8x32xf32, #tpu.memory_space<vmem>>, %arg4: memref<1x8x32xf32, #tpu.memory_space<vmem>>, %arg5: memref<32x32xf32, #tpu.memory_space<vmem>>, %arg6: memref<1x32xf32, #tpu.memory_space<vmem>>, %arg7: memref<32x32xf32, #tpu.memory_space<vmem>>, %arg8: memref<1x32xf32, #tpu.memory_space<vmem>>, %arg9: memref<32x32xf32, #tpu.memory_space<vmem>>, %arg10: memref<1x32xf32, #tpu.memory_space<vmem>>, %arg11: memref<32x32xf32, #tpu.memory_space<vmem>>, %arg12: memref<1x32xf32, #tpu.memory_space<vmem>>, %arg13: memref<1x8x32xf32, #tpu.memory_space<vmem>>, %arg14: memref<8x32xf32, #tpu.memory_space<vmem>>) attributes {dimension_semantics = [#tpu.dimension_semantics<parallel>, #tpu.dimension_semantics<parallel>], iteration_bounds = array<i64: 2, 1>, scalar_prefetch = 0 : i64, scratch_operands = 1 : i64, tpu.core_type = #tpu.core_type<tc>, window_params = [{transform_indices = @transform_0, window_bounds = array<i64: 1, 8, 32>}, {transform_indices = @transform_1, window_bounds = array<i64: 1, 8, 32>}, {transform_indices = @transform_2, window_bounds = array<i64: 1, 8, 32>}, {pipeline_mode = #tpu.pipeline_mode<synchronous>, transform_indices = @transform_3, window_bounds = array<i64: 32, 32>}, {pipeline_mode = #tpu.pipeline_mode<synchronous>, transform_indices = @transform_4, window_bounds = array<i64: 1, 32>}, {pipeline_mode = #tpu.pipeline_mode<synchronous>, transform_indices = @transform_5, window_bounds = array<i64: 32, 32>}, {pipeline_mode = #tpu.pipeline_mode<synchronous>, transform_indices = @transform_6, window_bounds = array<i64: 1, 32>}, {pipeline_mode = #tpu.pipeline_mode<synchronous>, transform_indices = @transform_7, window_bounds = array<i64: 32, 32>}, {pipeline_mode = #tpu.pipeline_mode<synchronous>, transform_indices = @transform_8, window_bounds = array<i64: 1, 32>}, {pipeline_mode = #tpu.pipeline_mode<synchronous>, transform_indices = @transform_9, window_bounds = array<i64: 32, 32>}, {pipeline_mode = #tpu.pipeline_mode<synchronous>, transform_indices = @transform_10, window_bounds = array<i64: 1, 32>}, {transform_indices = @transform_11, window_bounds = array<i64: 1, 8, 32>}]} {
    %c0 = arith.constant 0 : index
    %c0_0 = arith.constant 0 : index
    %c0_1 = arith.constant 0 : index
    %0 = vector.load %arg2[%c0, %c0_0, %c0_1] : memref<1x8x32xf32, #tpu.memory_space<vmem>>, vector<1x8x32xf32>
    %1 = vector.shape_cast %0 : vector<1x8x32xf32> to vector<8x32xf32>
    %c0_2 = arith.constant 0 : index
    %c0_3 = arith.constant 0 : index
    %c0_4 = arith.constant 0 : index
    %2 = vector.load %arg3[%c0_2, %c0_3, %c0_4] : memref<1x8x32xf32, #tpu.memory_space<vmem>>, vector<1x8x32xf32>
    %3 = vector.shape_cast %2 : vector<1x8x32xf32> to vector<8x32xf32>
    %c0_5 = arith.constant 0 : index
    %c0_6 = arith.constant 0 : index
    %c0_7 = arith.constant 0 : index
    %4 = vector.load %arg4[%c0_5, %c0_6, %c0_7] : memref<1x8x32xf32, #tpu.memory_space<vmem>>, vector<1x8x32xf32>
    %5 = vector.shape_cast %4 : vector<1x8x32xf32> to vector<8x32xf32>
    %c0_8 = arith.constant 0 : index
    %c0_9 = arith.constant 0 : index
    %6 = vector.load %arg5[%c0_8, %c0_9] : memref<32x32xf32, #tpu.memory_space<vmem>>, vector<32x32xf32>
    %cst = arith.constant dense<0.000000e+00> : vector<8x32xf32>
    %7 = tpu.matmul %1, %6, %cst {dimension_numbers = #tpu.dot_dimension_numbers<[1], [0], [0], [1], [0, 0, 1, 1], [], []>} : vector<8x32xf32>, vector<32x32xf32>, vector<8x32xf32> -> vector<8x32xf32>
    %c0_10 = arith.constant 0 : index
    %c0_11 = arith.constant 0 : index
    %8 = vector.load %arg6[%c0_10, %c0_11] : memref<1x32xf32, #tpu.memory_space<vmem>>, vector<1x32xf32>
    %9 = vector.broadcast %8 : vector<1x32xf32> to vector<8x32xf32>
    %10 = arith.addf %7, %9 : vector<8x32xf32>
    %c0_12 = arith.constant 0 : index
    %c0_13 = arith.constant 0 : index
    %11 = vector.load %arg7[%c0_12, %c0_13] : memref<32x32xf32, #tpu.memory_space<vmem>>, vector<32x32xf32>
    %cst_14 = arith.constant dense<0.000000e+00> : vector<8x32xf32>
    %12 = tpu.matmul %3, %11, %cst_14 {dimension_numbers = #tpu.dot_dimension_numbers<[1], [0], [0], [1], [0, 0, 1, 1], [], []>} : vector<8x32xf32>, vector<32x32xf32>, vector<8x32xf32> -> vector<8x32xf32>
    %c0_15 = arith.constant 0 : index
    %c0_16 = arith.constant 0 : index
    %13 = vector.load %arg8[%c0_15, %c0_16] : memref<1x32xf32, #tpu.memory_space<vmem>>, vector<1x32xf32>
    %14 = vector.broadcast %13 : vector<1x32xf32> to vector<8x32xf32>
    %15 = arith.addf %12, %14 : vector<8x32xf32>
    %c0_17 = arith.constant 0 : index
    %c0_18 = arith.constant 0 : index
    %16 = vector.load %arg9[%c0_17, %c0_18] : memref<32x32xf32, #tpu.memory_space<vmem>>, vector<32x32xf32>
    %cst_19 = arith.constant dense<0.000000e+00> : vector<8x32xf32>
    %17 = tpu.matmul %5, %16, %cst_19 {dimension_numbers = #tpu.dot_dimension_numbers<[1], [0], [0], [1], [0, 0, 1, 1], [], []>} : vector<8x32xf32>, vector<32x32xf32>, vector<8x32xf32> -> vector<8x32xf32>
    %c0_20 = arith.constant 0 : index
    %c0_21 = arith.constant 0 : index
    %18 = vector.load %arg10[%c0_20, %c0_21] : memref<1x32xf32, #tpu.memory_space<vmem>>, vector<1x32xf32>
    %19 = vector.broadcast %18 : vector<1x32xf32> to vector<8x32xf32>
    %20 = arith.addf %17, %19 : vector<8x32xf32>
    %cst_22 = arith.constant 0.353553385 : f32
    %21 = vector.broadcast %cst_22 : f32 to vector<8x32xf32>
    %22 = arith.mulf %10, %21 : vector<8x32xf32>
    %23 = vector.extract_strided_slice %22 {offsets = [0, 0], sizes = [8, 8], strides = [1, 1]} : vector<8x32xf32> to vector<8x8xf32>
    %24 = vector.extract_strided_slice %15 {offsets = [0, 0], sizes = [8, 8], strides = [1, 1]} : vector<8x32xf32> to vector<8x8xf32>
    %25 = vector.extract_strided_slice %20 {offsets = [0, 0], sizes = [8, 8], strides = [1, 1]} : vector<8x32xf32> to vector<8x8xf32>
    %cst_23 = arith.constant dense<0.000000e+00> : vector<8x8xf32>
    %26 = tpu.matmul %23, %24, %cst_23 {dimension_numbers = #tpu.dot_dimension_numbers<[1], [1], [0], [0], [0, 0, 1, 0], [], []>} : vector<8x8xf32>, vector<8x8xf32>, vector<8x8xf32> -> vector<8x8xf32>
    %cst_24 = arith.constant dense<0xFF800000> : vector<8xf32>
    %27 = vector.multi_reduction <maximumf>, %26, %cst_24 [1] : vector<8x8xf32> to vector<8xf32>
    %28 = vector.shape_cast %27 : vector<8xf32> to vector<8x1xf32>
    %29 = vector.broadcast %28 : vector<8x1xf32> to vector<8x8xf32>
    %30 = arith.subf %26, %29 : vector<8x8xf32>
    %31 = math.exp %30 : vector<8x8xf32>
    %cst_25 = arith.constant dense<0.000000e+00> : vector<8xf32>
    %32 = vector.multi_reduction <add>, %31, %cst_25 [1] : vector<8x8xf32> to vector<8xf32>
    %33 = vector.shape_cast %32 : vector<8xf32> to vector<8x1xf32>
    %34 = tpu.reciprocal %33 {approx = true} : vector<8x1xf32> -> vector<8x1xf32>
    %35 = vector.broadcast %34 : vector<8x1xf32> to vector<8x8xf32>
    %36 = arith.mulf %31, %35 : vector<8x8xf32>
    %cst_26 = arith.constant dense<0.000000e+00> : vector<8x8xf32>
    %37 = tpu.matmul %36, %25, %cst_26 {dimension_numbers = #tpu.dot_dimension_numbers<[1], [0], [0], [1], [0, 0, 1, 1], [], []>} : vector<8x8xf32>, vector<8x8xf32>, vector<8x8xf32> -> vector<8x8xf32>
    %c0_27 = arith.constant 0 : index
    %c0_28 = arith.constant 0 : index
    %38 = vector.load %arg14[%c0_27, %c0_28] : memref<8x32xf32, #tpu.memory_space<vmem>>, vector<8x8xf32>
    tpu.vector_store %arg14[%c0_27, %c0_28], %37 {strides = array<i32>} : memref<8x32xf32, #tpu.memory_space<vmem>>, vector<8x8xf32>,
    %39 = vector.extract_strided_slice %22 {offsets = [0, 8], sizes = [8, 8], strides = [1, 1]} : vector<8x32xf32> to vector<8x8xf32>
    %40 = vector.extract_strided_slice %15 {offsets = [0, 8], sizes = [8, 8], strides = [1, 1]} : vector<8x32xf32> to vector<8x8xf32>
    %41 = vector.extract_strided_slice %20 {offsets = [0, 8], sizes = [8, 8], strides = [1, 1]} : vector<8x32xf32> to vector<8x8xf32>
    %cst_29 = arith.constant dense<0.000000e+00> : vector<8x8xf32>
    %42 = tpu.matmul %39, %40, %cst_29 {dimension_numbers = #tpu.dot_dimension_numbers<[1], [1], [0], [0], [0, 0, 1, 0], [], []>} : vector<8x8xf32>, vector<8x8xf32>, vector<8x8xf32> -> vector<8x8xf32>
    %cst_30 = arith.constant dense<0xFF800000> : vector<8xf32>
    %43 = vector.multi_reduction <maximumf>, %42, %cst_30 [1] : vector<8x8xf32> to vector<8xf32>
    %44 = vector.shape_cast %43 : vector<8xf32> to vector<8x1xf32>
    %45 = vector.broadcast %44 : vector<8x1xf32> to vector<8x8xf32>
    %46 = arith.subf %42, %45 : vector<8x8xf32>
    %47 = math.exp %46 : vector<8x8xf32>
    %cst_31 = arith.constant dense<0.000000e+00> : vector<8xf32>
    %48 = vector.multi_reduction <add>, %47, %cst_31 [1] : vector<8x8xf32> to vector<8xf32>
    %49 = vector.shape_cast %48 : vector<8xf32> to vector<8x1xf32>
    %50 = tpu.reciprocal %49 {approx = true} : vector<8x1xf32> -> vector<8x1xf32>
    %51 = vector.broadcast %50 : vector<8x1xf32> to vector<8x8xf32>
    %52 = arith.mulf %47, %51 : vector<8x8xf32>
    %cst_32 = arith.constant dense<0.000000e+00> : vector<8x8xf32>
    %53 = tpu.matmul %52, %41, %cst_32 {dimension_numbers = #tpu.dot_dimension_numbers<[1], [0], [0], [1], [0, 0, 1, 1], [], []>} : vector<8x8xf32>, vector<8x8xf32>, vector<8x8xf32> -> vector<8x8xf32>
    %c0_33 = arith.constant 0 : index
    %c8 = arith.constant 8 : index
    %54 = vector.load %arg14[%c0_33, %c8] : memref<8x32xf32, #tpu.memory_space<vmem>>, vector<8x8xf32>
    tpu.vector_store %arg14[%c0_33, %c8], %53 {strides = array<i32>} : memref<8x32xf32, #tpu.memory_space<vmem>>, vector<8x8xf32>,
    %55 = vector.extract_strided_slice %22 {offsets = [0, 16], sizes = [8, 8], strides = [1, 1]} : vector<8x32xf32> to vector<8x8xf32>
    %56 = vector.extract_strided_slice %15 {offsets = [0, 16], sizes = [8, 8], strides = [1, 1]} : vector<8x32xf32> to vector<8x8xf32>
    %57 = vector.extract_strided_slice %20 {offsets = [0, 16], sizes = [8, 8], strides = [1, 1]} : vector<8x32xf32> to vector<8x8xf32>
    %cst_34 = arith.constant dense<0.000000e+00> : vector<8x8xf32>
    %58 = tpu.matmul %55, %56, %cst_34 {dimension_numbers = #tpu.dot_dimension_numbers<[1], [1], [0], [0], [0, 0, 1, 0], [], []>} : vector<8x8xf32>, vector<8x8xf32>, vector<8x8xf32> -> vector<8x8xf32>
    %cst_35 = arith.constant dense<0xFF800000> : vector<8xf32>
    %59 = vector.multi_reduction <maximumf>, %58, %cst_35 [1] : vector<8x8xf32> to vector<8xf32>
    %60 = vector.shape_cast %59 : vector<8xf32> to vector<8x1xf32>
    %61 = vector.broadcast %60 : vector<8x1xf32> to vector<8x8xf32>
    %62 = arith.subf %58, %61 : vector<8x8xf32>
    %63 = math.exp %62 : vector<8x8xf32>
    %cst_36 = arith.constant dense<0.000000e+00> : vector<8xf32>
    %64 = vector.multi_reduction <add>, %63, %cst_36 [1] : vector<8x8xf32> to vector<8xf32>
    %65 = vector.shape_cast %64 : vector<8xf32> to vector<8x1xf32>
    %66 = tpu.reciprocal %65 {approx = true} : vector<8x1xf32> -> vector<8x1xf32>
    %67 = vector.broadcast %66 : vector<8x1xf32> to vector<8x8xf32>
    %68 = arith.mulf %63, %67 : vector<8x8xf32>
    %cst_37 = arith.constant dense<0.000000e+00> : vector<8x8xf32>
    %69 = tpu.matmul %68, %57, %cst_37 {dimension_numbers = #tpu.dot_dimension_numbers<[1], [0], [0], [1], [0, 0, 1, 1], [], []>} : vector<8x8xf32>, vector<8x8xf32>, vector<8x8xf32> -> vector<8x8xf32>
    %c0_38 = arith.constant 0 : index
    %c16 = arith.constant 16 : index
    %70 = vector.load %arg14[%c0_38, %c16] : memref<8x32xf32, #tpu.memory_space<vmem>>, vector<8x8xf32>
    tpu.vector_store %arg14[%c0_38, %c16], %69 {strides = array<i32>} : memref<8x32xf32, #tpu.memory_space<vmem>>, vector<8x8xf32>,
    %71 = vector.extract_strided_slice %22 {offsets = [0, 24], sizes = [8, 8], strides = [1, 1]} : vector<8x32xf32> to vector<8x8xf32>
    %72 = vector.extract_strided_slice %15 {offsets = [0, 24], sizes = [8, 8], strides = [1, 1]} : vector<8x32xf32> to vector<8x8xf32>
    %73 = vector.extract_strided_slice %20 {offsets = [0, 24], sizes = [8, 8], strides = [1, 1]} : vector<8x32xf32> to vector<8x8xf32>
    %cst_39 = arith.constant dense<0.000000e+00> : vector<8x8xf32>
    %74 = tpu.matmul %71, %72, %cst_39 {dimension_numbers = #tpu.dot_dimension_numbers<[1], [1], [0], [0], [0, 0, 1, 0], [], []>} : vector<8x8xf32>, vector<8x8xf32>, vector<8x8xf32> -> vector<8x8xf32>
    %cst_40 = arith.constant dense<0xFF800000> : vector<8xf32>
    %75 = vector.multi_reduction <maximumf>, %74, %cst_40 [1] : vector<8x8xf32> to vector<8xf32>
    %76 = vector.shape_cast %75 : vector<8xf32> to vector<8x1xf32>
    %77 = vector.broadcast %76 : vector<8x1xf32> to vector<8x8xf32>
    %78 = arith.subf %74, %77 : vector<8x8xf32>
    %79 = math.exp %78 : vector<8x8xf32>
    %cst_41 = arith.constant dense<0.000000e+00> : vector<8xf32>
    %80 = vector.multi_reduction <add>, %79, %cst_41 [1] : vector<8x8xf32> to vector<8xf32>
    %81 = vector.shape_cast %80 : vector<8xf32> to vector<8x1xf32>
    %82 = tpu.reciprocal %81 {approx = true} : vector<8x1xf32> -> vector<8x1xf32>
    %83 = vector.broadcast %82 : vector<8x1xf32> to vector<8x8xf32>
    %84 = arith.mulf %79, %83 : vector<8x8xf32>
    %cst_42 = arith.constant dense<0.000000e+00> : vector<8x8xf32>
    %85 = tpu.matmul %84, %73, %cst_42 {dimension_numbers = #tpu.dot_dimension_numbers<[1], [0], [0], [1], [0, 0, 1, 1], [], []>} : vector<8x8xf32>, vector<8x8xf32>, vector<8x8xf32> -> vector<8x8xf32>
    %c0_43 = arith.constant 0 : index
    %c24 = arith.constant 24 : index
    %86 = vector.load %arg14[%c0_43, %c24] : memref<8x32xf32, #tpu.memory_space<vmem>>, vector<8x8xf32>
    tpu.vector_store %arg14[%c0_43, %c24], %85 {strides = array<i32>} : memref<8x32xf32, #tpu.memory_space<vmem>>, vector<8x8xf32>,
    %c0_44 = arith.constant 0 : index
    %c0_45 = arith.constant 0 : index
    %87 = vector.load %arg14[%c0_44, %c0_45] : memref<8x32xf32, #tpu.memory_space<vmem>>, vector<8x32xf32>
    %c0_46 = arith.constant 0 : index
    %c0_47 = arith.constant 0 : index
    %88 = vector.load %arg11[%c0_46, %c0_47] : memref<32x32xf32, #tpu.memory_space<vmem>>, vector<32x32xf32>
    %cst_48 = arith.constant dense<0.000000e+00> : vector<8x32xf32>
    %89 = tpu.matmul %87, %88, %cst_48 {dimension_numbers = #tpu.dot_dimension_numbers<[1], [0], [0], [1], [0, 0, 1, 1], [], []>} : vector<8x32xf32>, vector<32x32xf32>, vector<8x32xf32> -> vector<8x32xf32>
    %c0_49 = arith.constant 0 : index
    %c0_50 = arith.constant 0 : index
    %90 = vector.load %arg12[%c0_49, %c0_50] : memref<1x32xf32, #tpu.memory_space<vmem>>, vector<1x32xf32>
    %91 = vector.broadcast %90 : vector<1x32xf32> to vector<8x32xf32>
    %92 = arith.addf %89, %91 : vector<8x32xf32>
    %c0_51 = arith.constant 0 : index
    %c0_52 = arith.constant 0 : index
    %c0_53 = arith.constant 0 : index
    %93 = vector.load %arg13[%c0_51, %c0_52, %c0_53] : memref<1x8x32xf32, #tpu.memory_space<vmem>>, vector<1x8x32xf32>
    %94 = vector.shape_cast %93 : vector<1x8x32xf32> to vector<8x32xf32>
    %95 = vector.shape_cast %92 : vector<8x32xf32> to vector<1x8x32xf32>
    tpu.vector_store %arg13[%c0_51, %c0_52, %c0_53], %95 {strides = array<i32>} : memref<1x8x32xf32, #tpu.memory_space<vmem>>, vector<1x8x32xf32>,
    return
  }
  func.func @transform_0(%arg0: i32, %arg1: i32) -> (i32, i32, i32) {
    %c0_i32 = arith.constant 0 : i32
    %c0_i32_0 = arith.constant 0 : i32
    return %arg0, %arg1, %c0_i32 : i32, i32, i32
  }
  func.func @transform_1(%arg0: i32, %arg1: i32) -> (i32, i32, i32) {
    %c0_i32 = arith.constant 0 : i32
    %c0_i32_0 = arith.constant 0 : i32
    %c0_i32_1 = arith.constant 0 : i32
    return %arg0, %c0_i32, %c0_i32_0 : i32, i32, i32
  }
  func.func @transform_2(%arg0: i32, %arg1: i32) -> (i32, i32, i32) {
    %c0_i32 = arith.constant 0 : i32
    %c0_i32_0 = arith.constant 0 : i32
    %c0_i32_1 = arith.constant 0 : i32
    return %arg0, %c0_i32, %c0_i32_0 : i32, i32, i32
  }
  func.func @transform_3(%arg0: i32, %arg1: i32) -> (i32, i32) {
    %c0_i32 = arith.constant 0 : i32
    %c0_i32_0 = arith.constant 0 : i32
    %c0_i32_1 = arith.constant 0 : i32
    return %c0_i32, %c0_i32_0 : i32, i32
  }
  func.func @transform_4(%arg0: i32, %arg1: i32) -> (i32, i32) {
    %c0_i32 = arith.constant 0 : i32
    %c0_i32_0 = arith.constant 0 : i32
    %c0_i32_1 = arith.constant 0 : i32
    return %c0_i32, %c0_i32_0 : i32, i32
  }
  func.func @transform_5(%arg0: i32, %arg1: i32) -> (i32, i32) {
    %c0_i32 = arith.constant 0 : i32
    %c0_i32_0 = arith.constant 0 : i32
    %c0_i32_1 = arith.constant 0 : i32
    return %c0_i32, %c0_i32_0 : i32, i32
  }
  func.func @transform_6(%arg0: i32, %arg1: i32) -> (i32, i32) {
    %c0_i32 = arith.constant 0 : i32
    %c0_i32_0 = arith.constant 0 : i32
    %c0_i32_1 = arith.constant 0 : i32
    return %c0_i32, %c0_i32_0 : i32, i32
  }
  func.func @transform_7(%arg0: i32, %arg1: i32) -> (i32, i32) {
    %c0_i32 = arith.constant 0 : i32
    %c0_i32_0 = arith.constant 0 : i32
    %c0_i32_1 = arith.constant 0 : i32
    return %c0_i32, %c0_i32_0 : i32, i32
  }
  func.func @transform_8(%arg0: i32, %arg1: i32) -> (i32, i32) {
    %c0_i32 = arith.constant 0 : i32
    %c0_i32_0 = arith.constant 0 : i32
    %c0_i32_1 = arith.constant 0 : i32
    return %c0_i32, %c0_i32_0 : i32, i32
  }
  func.func @transform_9(%arg0: i32, %arg1: i32) -> (i32, i32) {
    %c0_i32 = arith.constant 0 : i32
    %c0_i32_0 = arith.constant 0 : i32
    %c0_i32_1 = arith.constant 0 : i32
    return %c0_i32, %c0_i32_0 : i32, i32
  }
  func.func @transform_10(%arg0: i32, %arg1: i32) -> (i32, i32) {
    %c0_i32 = arith.constant 0 : i32
    %c0_i32_0 = arith.constant 0 : i32
    %c0_i32_1 = arith.constant 0 : i32
    return %c0_i32, %c0_i32_0 : i32, i32
  }
  func.func @transform_11(%arg0: i32, %arg1: i32) -> (i32, i32, i32) {
    %c0_i32 = arith.constant 0 : i32
    %c0_i32_0 = arith.constant 0 : i32
    return %arg0, %arg1, %c0_i32 : i32, i32, i32
  }
}

</mosaic_0001>

<llo_original>
// kernel: tpu_custom_call.1
$region0: #{tpu_custom_call.1}
  #allocation0 [shape = 'u32[]', space=smem, size = 0x4, offset = 0x4, fixed_abs, tag = 'smem constant byte address 0x4 - core index']
  #allocation1 [shape = 'u32[144,128]{1,0:T(1,128)}', space=vmem, size = 0x12000, scoped, tag = 'internal scratch']
  #allocation2 [shape = 'f32[8,32]{1,0:T(8,128)}', space=vmem, size = 0x1000, scoped, tag = 'scratch operand']
  %s0 = inlined_call_operand.hbm [shape: f32[2,8,32], index: 0, kind: input, shape index: {}]
  %s1 = inlined_call_operand.hbm [shape: f32[2,8,32], index: 1, kind: input, shape index: {}]
  %s2 = inlined_call_operand.hbm [shape: f32[2,8,32], index: 2, kind: input, shape index: {}]
  %s3 = inlined_call_operand.hbm [shape: f32[32,32], index: 3, kind: input, shape index: {}]
  %s4 = inlined_call_operand.vmem [shape: f32[1,32], index: 4, kind: input, shape index: {}]
  %s5 = inlined_call_operand.hbm [shape: f32[32,32], index: 5, kind: input, shape index: {}]
  %s6 = inlined_call_operand.vmem [shape: f32[1,32], index: 6, kind: input, shape index: {}]
  %s7 = inlined_call_operand.hbm [shape: f32[32,32], index: 7, kind: input, shape index: {}]
  %s8 = inlined_call_operand.vmem [shape: f32[1,32], index: 8, kind: input, shape index: {}]
  %s9 = inlined_call_operand.hbm [shape: f32[32,32], index: 9, kind: input, shape index: {}]
  %s10 = inlined_call_operand.vmem [shape: f32[1,32], index: 10, kind: input, shape index: {}]
  %s11 = inlined_call_operand.hbm [shape: f32[2,8,32], index: 11, kind: output, shape index: {}]
  %s12 = sld [smem:[#allocation0]]
  $region105: #{tpu_custom_call.1} parent=0
    _
  %s14 = ssub.s32 1, %s12
  %s15 = scalar_select 0, %s14, %s12
  $region1: #{tpu_custom_call.1} parent=0
    #allocation3 [shape = 'u8[8192]{0}', space=vmem, size = 0x2000, scoped, tag = 'input window, operand 0']
    #allocation4 [shape = 's32[2]{0}', space=sflag, size = 0x8, scoped, tag = 'scoped memory for tpu_custom_call.1']
    #allocation5 [shape = 's32[2]{0}', space=sflag, size = 0x8, scoped, tag = 'scoped memory for tpu_custom_call.1']
    #allocation6 [shape = 'u8[8192]{0}', space=vmem, size = 0x2000, scoped, tag = 'input window, operand 1']
    #allocation7 [shape = 's32[2]{0}', space=sflag, size = 0x8, scoped, tag = 'scoped memory for tpu_custom_call.1']
    #allocation8 [shape = 'u8[8192]{0}', space=vmem, size = 0x2000, scoped, tag = 'input window, operand 2']
    #allocation9 [shape = 'u8[16384]{0}', space=vmem, size = 0x4000, scoped, tag = 'input window, operand 3, single buffered']
    #allocation10 [shape = 's32[1]{0}', space=sflag, size = 0x4, scoped, tag = 'scoped memory for tpu_custom_call.1']
    #allocation11 [shape = 'u8[16384]{0}', space=vmem, size = 0x4000, scoped, tag = 'input window, operand 5, single buffered']
    #allocation12 [shape = 'u8[16384]{0}', space=vmem, size = 0x4000, scoped, tag = 'input window, operand 7, single buffered']
    #allocation13 [shape = 's32[1]{0}', space=sflag, size = 0x4, scoped, tag = 'scoped memory for tpu_custom_call.1']
    #allocation14 [shape = 'u8[16384]{0}', space=vmem, size = 0x4000, scoped, tag = 'input window, operand 9, single buffered']
    #allocation15 [shape = 'u8[8192]{0}', space=vmem, size = 0x2000, scoped, tag = 'output window, operand 0']
    %16 = vsyncpa [#allocation4], 0
    %s17 = scalar_lea.sflag [#allocation4], 1
    %18 = vsyncpa %s17, 0
    %19 = vsyncpa [#allocation7], 0
    %s20 = scalar_lea.sflag [#allocation7], 1
    %21 = vsyncpa %s20, 0
    %22 = vsyncpa [#allocation10], 0
    %23 = vsyncpa [#allocation13], 0
    %24 = vsyncpa [#allocation5], 0
    %s25 = scalar_lea.sflag [#allocation5], 1
    %26 = vsyncpa %s25, 0
    loop: start=0, step=1, limit=4
    $region2: #{tpu_custom_call.1} parent=1 // loop_pre_header
      _
    $region3: #{tpu_custom_call.1} parent=1 // loop_header
      %s28 = sphi 0, %s32
      %p29 = scmp.ge.s32.totalorder %s28, 4
      %s35 = sphi 0, %s47
      %s36 = sphi 0, %s43
      %s37 = sphi 0, %s35
      %s38 = sphi 0, %s36
      %s39 = sphi 0, %s37
      %s40 = sphi 0, %s38
      %s52 = sphi 0, %s54
      %s55 = sphi 0, %s52
      %s56 = sphi 0, %s55
      %s72 = sphi 0, %s56
      %s78 = sphi 0, %s80
      %s81 = sphi 0, %s78
      %s82 = sphi 0, %s81
      %s98 = sphi 0, %s82
      %s104 = sphi 0, %s106
      %s107 = sphi 0, %s104
      %s108 = sphi 0, %s107
      %s124 = sphi 0, %s108
      %s128 = sphi 0, %s128
      %s130 = sphi 0, %s128
      %s131 = sphi 0, %s130
      %s145 = sphi 0, %s131
      %s149 = sphi 0, %s149
      %s151 = sphi 0, %s149
      %s152 = sphi 0, %s151
      %s166 = sphi 0, %s152
      %s170 = sphi 0, %s170
      %s172 = sphi 0, %s170
      %s173 = sphi 0, %s172
      %s187 = sphi 0, %s173
      %s191 = sphi 0, %s191
      %s193 = sphi 0, %s191
      %s194 = sphi 0, %s193
      %s208 = sphi 0, %s194
      %s212 = sphi 0, %s212
      %s214 = sphi 0, %s212
      %s215 = sphi 0, %s214
      %s229 = sphi 0, %s215
      %s233 = sphi 0, %s233
      %s235 = sphi 0, %s233
      %s236 = sphi 0, %s235
      %s250 = sphi 0, %s236
      %s254 = sphi 0, %s254
      %s256 = sphi 0, %s254
      %s257 = sphi 0, %s256
      %s271 = sphi 0, %s257
      %s275 = sphi 0, %s275
      %s277 = sphi 0, %s275
      %s278 = sphi 0, %s277
      %s292 = sphi 0, %s278
      %s300 = sphi 0, %s302
      %s303 = sphi 0, %s300
      %s304 = sphi 0, %s303
      %s320 = sphi 0, %s304
    $region4: #{tpu_custom_call.1} parent=1 // loop_header_branch
      %31 = sbr.rel (%p29) target = $region8
    $region5: #{tpu_custom_call.1} parent=1 // loop_body
      %s33 = ssub.s32 %s28, 1
      %s34 = ssub.s32 %s28, 2
      %s41 = sadd.s32 1, %s36
      %p42 = scmp.ge.s32.totalorder %s41, 1
      %s43 = scalar_select %p42, 0, %s41
      %s44 = sadd.s32 1, %s35
      %s45 = scalar_select %p42, %s44, %s35
      %p46 = scmp.ge.s32.totalorder %s45, 2
      %s47 = scalar_select %p46, 0, %s45
      %s48 = ssub.s32 %s35, %s47
      %s49 = ssub.s32 %s36, %s43
      %s50 = sor.u32 %s48, %s49
      %p51 = scmp.eq.s32.totalorder %s50, 0
      %s53 = sadd.s32 %s52, 1
      %s54 = scalar_select %p51, %s52, %s53
      %p57 = pneg %p51
      %p58 = scmp.eq.s32.totalorder %s28, 1
      %p59 = por %p57, %p58
      %p60 = scmp.ne.s32.totalorder %s52, %s55
      %p61 = scmp.eq.s32.totalorder %s28, 0
      %p62 = por %p60, %p61
      %p63 = scmp.ne.s32.totalorder %s52, %s55
      %p64 = scmp.eq.s32.totalorder %s33, 1
      %p65 = por %p63, %p64
      %p66 = scmp.ne.s32.totalorder %s55, %s56
      %p67 = scmp.eq.s32.totalorder %s33, 0
      %p68 = por %p66, %p67
      %p69 = scmp.ne.s32.totalorder %s55, %s56
      %p70 = scmp.eq.s32.totalorder %s34, 1
      %p71 = por %p69, %p70
      %p73 = scmp.ne.s32.totalorder %s56, %s72
      %p74 = scmp.eq.s32.totalorder %s34, 0
      %p75 = por %p73, %p74
      %s76 = ssub.s32 %s35, %s47
      %p77 = scmp.eq.s32.totalorder %s76, 0
      %s79 = sadd.s32 %s78, 1
      %s80 = scalar_select %p77, %s78, %s79
      %p83 = pneg %p77
      %p84 = scmp.eq.s32.totalorder %s28, 1
      %p85 = por %p83, %p84
      %p86 = scmp.ne.s32.totalorder %s78, %s81
      %p87 = scmp.eq.s32.totalorder %s28, 0
      %p88 = por %p86, %p87
      %p89 = scmp.ne.s32.totalorder %s78, %s81
      %p90 = scmp.eq.s32.totalorder %s33, 1
      %p91 = por %p89, %p90
      %p92 = scmp.ne.s32.totalorder %s81, %s82
      %p93 = scmp.eq.s32.totalorder %s33, 0
      %p94 = por %p92, %p93
      %p95 = scmp.ne.s32.totalorder %s81, %s82
      %p96 = scmp.eq.s32.totalorder %s34, 1
      %p97 = por %p95, %p96
      %p99 = scmp.ne.s32.totalorder %s82, %s98
      %p100 = scmp.eq.s32.totalorder %s34, 0
      %p101 = por %p99, %p100
      %s102 = ssub.s32 %s35, %s47
      %p103 = scmp.eq.s32.totalorder %s102, 0
      %s105 = sadd.s32 %s104, 1
      %s106 = scalar_select %p103, %s104, %s105
      %p109 = pneg %p103
      %p110 = scmp.eq.s32.totalorder %s28, 1
      %p111 = por %p109, %p110
      %p112 = scmp.ne.s32.totalorder %s104, %s107
      %p113 = scmp.eq.s32.totalorder %s28, 0
      %p114 = por %p112, %p113
      %p115 = scmp.ne.s32.totalorder %s104, %s107
      %p116 = scmp.eq.s32.totalorder %s33, 1
      %p117 = por %p115, %p116
      %p118 = scmp.ne.s32.totalorder %s107, %s108
      %p119 = scmp.eq.s32.totalorder %s33, 0
      %p120 = por %p118, %p119
      %p121 = scmp.ne.s32.totalorder %s107, %s108
      %p122 = scmp.eq.s32.totalorder %s34, 1
      %p123 = por %p121, %p122
      %p125 = scmp.ne.s32.totalorder %s108, %s124
      %p126 = scmp.eq.s32.totalorder %s34, 0
      %p127 = por %p125, %p126
      %s129 = sadd.s32 %s128, 1
      %p132 = scmp.eq.s32.totalorder %s28, 1
      %p133 = scmp.ne.s32.totalorder %s128, %s130
      %p134 = scmp.eq.s32.totalorder %s28, 0
      %p135 = por %p133, %p134
      %p136 = scmp.ne.s32.totalorder %s128, %s130
      %p137 = scmp.eq.s32.totalorder %s33, 1
      %p138 = por %p136, %p137
      %p139 = scmp.ne.s32.totalorder %s130, %s131
      %p140 = scmp.eq.s32.totalorder %s33, 0
      %p141 = por %p139, %p140
      %p142 = scmp.ne.s32.totalorder %s130, %s131
      %p143 = scmp.eq.s32.totalorder %s34, 1
      %p144 = por %p142, %p143
      %p146 = scmp.ne.s32.totalorder %s131, %s145
      %p147 = scmp.eq.s32.totalorder %s34, 0
      %p148 = por %p146, %p147
      %s150 = sadd.s32 %s149, 1
      %p153 = scmp.eq.s32.totalorder %s28, 1
      %p154 = scmp.ne.s32.totalorder %s149, %s151
      %p155 = scmp.eq.s32.totalorder %s28, 0
      %p156 = por %p154, %p155
      %p157 = scmp.ne.s32.totalorder %s149, %s151
      %p158 = scmp.eq.s32.totalorder %s33, 1
      %p159 = por %p157, %p158
      %p160 = scmp.ne.s32.totalorder %s151, %s152
      %p161 = scmp.eq.s32.totalorder %s33, 0
      %p162 = por %p160, %p161
      %p163 = scmp.ne.s32.totalorder %s151, %s152
      %p164 = scmp.eq.s32.totalorder %s34, 1
      %p165 = por %p163, %p164
      %p167 = scmp.ne.s32.totalorder %s152, %s166
      %p168 = scmp.eq.s32.totalorder %s34, 0
      %p169 = por %p167, %p168
      %s171 = sadd.s32 %s170, 1
      %p174 = scmp.eq.s32.totalorder %s28, 1
      %p175 = scmp.ne.s32.totalorder %s170, %s172
      %p176 = scmp.eq.s32.totalorder %s28, 0
      %p177 = por %p175, %p176
      %p178 = scmp.ne.s32.totalorder %s170, %s172
      %p179 = scmp.eq.s32.totalorder %s33, 1
      %p180 = por %p178, %p179
      %p181 = scmp.ne.s32.totalorder %s172, %s173
      %p182 = scmp.eq.s32.totalorder %s33, 0
      %p183 = por %p181, %p182
      %p184 = scmp.ne.s32.totalorder %s172, %s173
      %p185 = scmp.eq.s32.totalorder %s34, 1
      %p186 = por %p184, %p185
      %p188 = scmp.ne.s32.totalorder %s173, %s187
      %p189 = scmp.eq.s32.totalorder %s34, 0
      %p190 = por %p188, %p189
      %s192 = sadd.s32 %s191, 1
      %p195 = scmp.eq.s32.totalorder %s28, 1
      %p196 = scmp.ne.s32.totalorder %s191, %s193
      %p197 = scmp.eq.s32.totalorder %s28, 0
      %p198 = por %p196, %p197
      %p199 = scmp.ne.s32.totalorder %s191, %s193
      %p200 = scmp.eq.s32.totalorder %s33, 1
      %p201 = por %p199, %p200
      %p202 = scmp.ne.s32.totalorder %s193, %s194
      %p203 = scmp.eq.s32.totalorder %s33, 0
      %p204 = por %p202, %p203
      %p205 = scmp.ne.s32.totalorder %s193, %s194
      %p206 = scmp.eq.s32.totalorder %s34, 1
      %p207 = por %p205, %p206
      %p209 = scmp.ne.s32.totalorder %s194, %s208
      %p210 = scmp.eq.s32.totalorder %s34, 0
      %p211 = por %p209, %p210
      %s213 = sadd.s32 %s212, 1
      %p216 = scmp.eq.s32.totalorder %s28, 1
      %p217 = scmp.ne.s32.totalorder %s212, %s214
      %p218 = scmp.eq.s32.totalorder %s28, 0
      %p219 = por %p217, %p218
      %p220 = scmp.ne.s32.totalorder %s212, %s214
      %p221 = scmp.eq.s32.totalorder %s33, 1
      %p222 = por %p220, %p221
      %p223 = scmp.ne.s32.totalorder %s214, %s215
      %p224 = scmp.eq.s32.totalorder %s33, 0
      %p225 = por %p223, %p224
      %p226 = scmp.ne.s32.totalorder %s214, %s215
      %p227 = scmp.eq.s32.totalorder %s34, 1
      %p228 = por %p226, %p227
      %p230 = scmp.ne.s32.totalorder %s215, %s229
      %p231 = scmp.eq.s32.totalorder %s34, 0
      %p232 = por %p230, %p231
      %s234 = sadd.s32 %s233, 1
      %p237 = scmp.eq.s32.totalorder %s28, 1
      %p238 = scmp.ne.s32.totalorder %s233, %s235
      %p239 = scmp.eq.s32.totalorder %s28, 0
      %p240 = por %p238, %p239
      %p241 = scmp.ne.s32.totalorder %s233, %s235
      %p242 = scmp.eq.s32.totalorder %s33, 1
      %p243 = por %p241, %p242
      %p244 = scmp.ne.s32.totalorder %s235, %s236
      %p245 = scmp.eq.s32.totalorder %s33, 0
      %p246 = por %p244, %p245
      %p247 = scmp.ne.s32.totalorder %s235, %s236
      %p248 = scmp.eq.s32.totalorder %s34, 1
      %p249 = por %p247, %p248
      %p251 = scmp.ne.s32.totalorder %s236, %s250
      %p252 = scmp.eq.s32.totalorder %s34, 0
      %p253 = por %p251, %p252
      %s255 = sadd.s32 %s254, 1
      %p258 = scmp.eq.s32.totalorder %s28, 1
      %p259 = scmp.ne.s32.totalorder %s254, %s256
      %p260 = scmp.eq.s32.totalorder %s28, 0
      %p261 = por %p259, %p260
      %p262 = scmp.ne.s32.totalorder %s254, %s256
      %p263 = scmp.eq.s32.totalorder %s33, 1
      %p264 = por %p262, %p263
      %p265 = scmp.ne.s32.totalorder %s256, %s257
      %p266 = scmp.eq.s32.totalorder %s33, 0
      %p267 = por %p265, %p266
      %p268 = scmp.ne.s32.totalorder %s256, %s257
      %p269 = scmp.eq.s32.totalorder %s34, 1
      %p270 = por %p268, %p269
      %p272 = scmp.ne.s32.totalorder %s257, %s271
      %p273 = scmp.eq.s32.totalorder %s34, 0
      %p274 = por %p272, %p273
      %s276 = sadd.s32 %s275, 1
      %p279 = scmp.eq.s32.totalorder %s28, 1
      %p280 = scmp.ne.s32.totalorder %s275, %s277
      %p281 = scmp.eq.s32.totalorder %s28, 0
      %p282 = por %p280, %p281
      %p283 = scmp.ne.s32.totalorder %s275, %s277
      %p284 = scmp.eq.s32.totalorder %s33, 1
      %p285 = por %p283, %p284
      %p286 = scmp.ne.s32.totalorder %s277, %s278
      %p287 = scmp.eq.s32.totalorder %s33, 0
      %p288 = por %p286, %p287
      %p289 = scmp.ne.s32.totalorder %s277, %s278
      %p290 = scmp.eq.s32.totalorder %s34, 1
      %p291 = por %p289, %p290
      %p293 = scmp.ne.s32.totalorder %s278, %s292
      %p294 = scmp.eq.s32.totalorder %s34, 0
      %p295 = por %p293, %p294
      %s296 = ssub.s32 %s35, %s47
      %s297 = ssub.s32 %s36, %s43
      %s298 = sor.u32 %s296, %s297
      %p299 = scmp.eq.s32.totalorder %s298, 0
      %s301 = sadd.s32 %s300, 1
      %s302 = scalar_select %p299, %s300, %s301
      %p305 = pneg %p299
      %p306 = scmp.eq.s32.totalorder %s28, 1
      %p307 = por %p305, %p306
      %p308 = scmp.ne.s32.totalorder %s300, %s303
      %p309 = scmp.eq.s32.totalorder %s28, 0
      %p310 = por %p308, %p309
      %p311 = scmp.ne.s32.totalorder %s300, %s303
      %p312 = scmp.eq.s32.totalorder %s33, 1
      %p313 = por %p311, %p312
      %p314 = scmp.ne.s32.totalorder %s303, %s304
      %p315 = scmp.eq.s32.totalorder %s33, 0
      %p316 = por %p314, %p315
      %p317 = scmp.ne.s32.totalorder %s303, %s304
      %p318 = scmp.eq.s32.totalorder %s34, 1
      %p319 = por %p317, %p318
      %p321 = scmp.ne.s32.totalorder %s304, %s320
      %p322 = scmp.eq.s32.totalorder %s34, 0
      %p323 = por %p321, %p322
      %p324 = scmp.le.s32.totalorder 1, %s28
      %p325 = scmp.lt.s32.totalorder %s28, 3
      %p326 = pnand %p324, %p325
      %p327 = pneg %p326
      // Predicated region
      $region9: #{tpu_custom_call.1} parent=5 // pred_check
        _
      $region10: #{tpu_custom_call.1} parent=5 // pred_check_branch
        %329 = sbr.rel (%p326) target = $region12
      $region11: #{tpu_custom_call.1} parent=5 // pred_region
        %s330 = ssub.s32 %s28, 1
        // Predicated region
        $region13: #{tpu_custom_call.1} parent=11 // pred_check
          %p331 = pneg %p141
        $region14: #{tpu_custom_call.1} parent=11 // pred_check_branch
          %333 = sbr.rel (%p331) target = $region16
        $region15: #{tpu_custom_call.1} parent=11 // pred_region
          %s335 = ssub.s32 512, 512
          %336 = vsyncadd [#allocation10], %s335
          %s337 = sshll.u32 [#allocation9], 4
          %s338 = int_to_ptr.vmem [resolvable:$true] %s337
          %343 = dma.hbm_to_vmem [thread:$0]  %s3, 512, %s338, [#allocation10], 128, 128, 8
        $region16: #{tpu_custom_call.1} parent=11 // pred_fallthru
          _
        // Predicated region
        $region17: #{tpu_custom_call.1} parent=11 // pred_check
          %p344 = pneg %p162
        $region18: #{tpu_custom_call.1} parent=11 // pred_check_branch
          %346 = sbr.rel (%p344) target = $region20
        $region19: #{tpu_custom_call.1} parent=11 // pred_region
          _
        $region20: #{tpu_custom_call.1} parent=11 // pred_fallthru
          _
        // Predicated region
        $region21: #{tpu_custom_call.1} parent=11 // pred_check
          %p347 = pneg %p183
        $region22: #{tpu_custom_call.1} parent=11 // pred_check_branch
          %349 = sbr.rel (%p347) target = $region24
        $region23: #{tpu_custom_call.1} parent=11 // pred_region
          %s351 = ssub.s32 512, 512
          %352 = vsyncadd [#allocation10], %s351
          %s353 = sshll.u32 [#allocation11], 4
          %s354 = int_to_ptr.vmem [resolvable:$true] %s353
          %359 = dma.hbm_to_vmem [thread:$0]  %s5, 512, %s354, [#allocation10], 128, 128, 8
        $region24: #{tpu_custom_call.1} parent=11 // pred_fallthru
          _
        // Predicated region
        $region25: #{tpu_custom_call.1} parent=11 // pred_check
          %p360 = pneg %p204
        $region26: #{tpu_custom_call.1} parent=11 // pred_check_branch
          %362 = sbr.rel (%p360) target = $region28
        $region27: #{tpu_custom_call.1} parent=11 // pred_region
          _
        $region28: #{tpu_custom_call.1} parent=11 // pred_fallthru
          _
        // Predicated region
        $region29: #{tpu_custom_call.1} parent=11 // pred_check
          %p363 = pneg %p225
        $region30: #{tpu_custom_call.1} parent=11 // pred_check_branch
          %365 = sbr.rel (%p363) target = $region32
        $region31: #{tpu_custom_call.1} parent=11 // pred_region
          %s367 = ssub.s32 512, 512
          %368 = vsyncadd [#allocation13], %s367
          %s369 = sshll.u32 [#allocation12], 4
          %s370 = int_to_ptr.vmem [resolvable:$true] %s369
          %375 = dma.hbm_to_vmem [thread:$0]  %s7, 512, %s370, [#allocation13], 128, 128, 8
        $region32: #{tpu_custom_call.1} parent=11 // pred_fallthru
          _
        // Predicated region
        $region33: #{tpu_custom_call.1} parent=11 // pred_check
          %p376 = pneg %p246
        $region34: #{tpu_custom_call.1} parent=11 // pred_check_branch
          %378 = sbr.rel (%p376) target = $region36
        $region35: #{tpu_custom_call.1} parent=11 // pred_region
          _
        $region36: #{tpu_custom_call.1} parent=11 // pred_fallthru
          _
        // Predicated region
        $region37: #{tpu_custom_call.1} parent=11 // pred_check
          %p379 = pneg %p267
        $region38: #{tpu_custom_call.1} parent=11 // pred_check_branch
          %381 = sbr.rel (%p379) target = $region40
        $region39: #{tpu_custom_call.1} parent=11 // pred_region
          %s383 = ssub.s32 512, 512
          %384 = vsyncadd [#allocation13], %s383
          %s385 = sshll.u32 [#allocation14], 4
          %s386 = int_to_ptr.vmem [resolvable:$true] %s385
          %391 = dma.hbm_to_vmem [thread:$0]  %s9, 512, %s386, [#allocation13], 128, 128, 8
        $region40: #{tpu_custom_call.1} parent=11 // pred_fallthru
          _
        // Predicated region
        $region41: #{tpu_custom_call.1} parent=11 // pred_check
          %p392 = pneg %p288
        $region42: #{tpu_custom_call.1} parent=11 // pred_check_branch
          %394 = sbr.rel (%p392) target = $region44
        $region43: #{tpu_custom_call.1} parent=11 // pred_region
          _
        $region44: #{tpu_custom_call.1} parent=11 // pred_fallthru
          _
      $region12: #{tpu_custom_call.1} parent=5 // pred_fallthru
        _
      %p395 = scmp.lt.s32.totalorder %s28, 2
      // Predicated region
      $region45: #{tpu_custom_call.1} parent=5 // pred_check
        %p396 = pneg %p395
      $region46: #{tpu_custom_call.1} parent=5 // pred_check_branch
        %398 = sbr.rel (%p396) target = $region48
      $region47: #{tpu_custom_call.1} parent=5 // pred_region
        // Predicated region
        $region49: #{tpu_custom_call.1} parent=47 // pred_check
          %p399 = pneg %p62
        $region50: #{tpu_custom_call.1} parent=47 // pred_check_branch
          %401 = sbr.rel (%p399) target = $region52
        $region51: #{tpu_custom_call.1} parent=47 // pred_region
          %s402 = sand.u32 %s52, 1
          %s403 = scalar_lea.sflag [#allocation4], %s402
          %s404 = sand.u32 %s52, 1
          %s405 = smul.addr %s404, 8
          %s406 = scalar_lea.vmem [#allocation3], %s405
          %s408 = ssub.s32 128, 128
          %409 = vsyncadd %s403, %s408
          %s410 = sadd.s32 %s36, %s35
          %s411 = smul.addr %s410, 128
          %s412 = scalar_lea.hbm %s0, %s411
          %s414 = sshll.u32 %s406, 4
          %s415 = int_to_ptr.vmem [resolvable:$true] %s414
          %417 = dma.hbm_to_vmem [thread:$0]  %s412, 128, %s415, %s403
        $region52: #{tpu_custom_call.1} parent=47 // pred_fallthru
          _
        // Predicated region
        $region53: #{tpu_custom_call.1} parent=47 // pred_check
          %p418 = pneg %p88
        $region54: #{tpu_custom_call.1} parent=47 // pred_check_branch
          %420 = sbr.rel (%p418) target = $region56
        $region55: #{tpu_custom_call.1} parent=47 // pred_region
          %s421 = sand.u32 %s28, 1
          %s422 = scalar_lea.sflag [#allocation7], %s421
          %s423 = sand.u32 %s78, 1
          %s424 = smul.addr %s423, 8
          %s425 = scalar_lea.vmem [#allocation6], %s424
          %s427 = ssub.s32 128, 128
          %428 = vsyncadd %s422, %s427
          %s429 = smul.addr %s35, 128
          %s430 = scalar_lea.hbm %s1, %s429
          %s432 = sshll.u32 %s425, 4
          %s433 = int_to_ptr.vmem [resolvable:$true] %s432
          %435 = dma.hbm_to_vmem [thread:$0]  %s430, 128, %s433, %s422
        $region56: #{tpu_custom_call.1} parent=47 // pred_fallthru
          _
        // Predicated region
        $region57: #{tpu_custom_call.1} parent=47 // pred_check
          %p436 = pneg %p114
        $region58: #{tpu_custom_call.1} parent=47 // pred_check_branch
          %438 = sbr.rel (%p436) target = $region60
        $region59: #{tpu_custom_call.1} parent=47 // pred_region
          %s439 = sand.u32 %s28, 1
          %s440 = scalar_lea.sflag [#allocation7], %s439
          %s441 = sand.u32 %s104, 1
          %s442 = smul.addr %s441, 8
          %s443 = scalar_lea.vmem [#allocation8], %s442
          %s445 = ssub.s32 128, 128
          %446 = vsyncadd %s440, %s445
          %s447 = smul.addr %s35, 128
          %s448 = scalar_lea.hbm %s2, %s447
          %s450 = sshll.u32 %s443, 4
          %s451 = int_to_ptr.vmem [resolvable:$true] %s450
          %453 = dma.hbm_to_vmem [thread:$0]  %s448, 128, %s451, %s440
        $region60: #{tpu_custom_call.1} parent=47 // pred_fallthru
          _
      $region48: #{tpu_custom_call.1} parent=5 // pred_fallthru
        _
      %p454 = scmp.le.s32.totalorder 1, %s28
      %p455 = scmp.lt.s32.totalorder %s28, 3
      %p456 = pnand %p454, %p455
      %p457 = pneg %p456
      // Predicated region
      $region61: #{tpu_custom_call.1} parent=5 // pred_check
        _
      $region62: #{tpu_custom_call.1} parent=5 // pred_check_branch
        %459 = sbr.rel (%p456) target = $region64
      $region63: #{tpu_custom_call.1} parent=5 // pred_region
        %s460 = ssub.s32 %s28, 1
        %s461 = sand.u32 %s55, 1
        %s462 = scalar_lea.sflag [#allocation4], %s461
        %s463 = sand.u32 %s55, 1
        %s464 = smul.addr %s463, 8
        %s465 = scalar_lea.vmem [#allocation3], %s464
        // Predicated region
        $region65: #{tpu_custom_call.1} parent=63 // pred_check
          %p466 = pneg %p68
        $region66: #{tpu_custom_call.1} parent=63 // pred_check_branch
          %468 = sbr.rel (%p466) target = $region68
        $region67: #{tpu_custom_call.1} parent=63 // pred_region
          %469 = dma.done %s462, 128
        $region68: #{tpu_custom_call.1} parent=63 // pred_fallthru
          _
        %s470 = sand.u32 %s33, 1
        %s471 = scalar_lea.sflag [#allocation7], %s470
        %s472 = sand.u32 %s81, 1
        %s473 = smul.addr %s472, 8
        %s474 = scalar_lea.vmem [#allocation6], %s473
        // Predicated region
        $region69: #{tpu_custom_call.1} parent=63 // pred_check
          %p475 = pneg %p94
        $region70: #{tpu_custom_call.1} parent=63 // pred_check_branch
          %477 = sbr.rel (%p475) target = $region72
        $region71: #{tpu_custom_call.1} parent=63 // pred_region
          %478 = dma.done %s471, 128
        $region72: #{tpu_custom_call.1} parent=63 // pred_fallthru
          _
        %s479 = sand.u32 %s33, 1
        %s480 = scalar_lea.sflag [#allocation7], %s479
        %s481 = sand.u32 %s107, 1
        %s482 = smul.addr %s481, 8
        %s483 = scalar_lea.vmem [#allocation8], %s482
        // Predicated region
        $region73: #{tpu_custom_call.1} parent=63 // pred_check
          %p484 = pneg %p120
        $region74: #{tpu_custom_call.1} parent=63 // pred_check_branch
          %486 = sbr.rel (%p484) target = $region76
        $region75: #{tpu_custom_call.1} parent=63 // pred_region
          %487 = dma.done %s480, 128
        $region76: #{tpu_custom_call.1} parent=63 // pred_fallthru
          _
        // Predicated region
        $region77: #{tpu_custom_call.1} parent=63 // pred_check
          %p488 = pneg %p141
        $region78: #{tpu_custom_call.1} parent=63 // pred_check_branch
          %490 = sbr.rel (%p488) target = $region80
        $region79: #{tpu_custom_call.1} parent=63 // pred_region
          %491 = dma.done [#allocation10], 512
        $region80: #{tpu_custom_call.1} parent=63 // pred_fallthru
          _
        // Predicated region
        $region81: #{tpu_custom_call.1} parent=63 // pred_check
          %p492 = pneg %p183
        $region82: #{tpu_custom_call.1} parent=63 // pred_check_branch
          %494 = sbr.rel (%p492) target = $region84
        $region83: #{tpu_custom_call.1} parent=63 // pred_region
          %495 = dma.done [#allocation10], 512
        $region84: #{tpu_custom_call.1} parent=63 // pred_fallthru
          _
        // Predicated region
        $region85: #{tpu_custom_call.1} parent=63 // pred_check
          %p496 = pneg %p225
        $region86: #{tpu_custom_call.1} parent=63 // pred_check_branch
          %498 = sbr.rel (%p496) target = $region88
        $region87: #{tpu_custom_call.1} parent=63 // pred_region
          %499 = dma.done [#allocation13], 512
        $region88: #{tpu_custom_call.1} parent=63 // pred_fallthru
          _
        // Predicated region
        $region89: #{tpu_custom_call.1} parent=63 // pred_check
          %p500 = pneg %p267
        $region90: #{tpu_custom_call.1} parent=63 // pred_check_branch
          %502 = sbr.rel (%p500) target = $region92
        $region91: #{tpu_custom_call.1} parent=63 // pred_region
          %503 = dma.done [#allocation13], 512
        $region92: #{tpu_custom_call.1} parent=63 // pred_fallthru
          _
        %s504 = sand.u32 %s55, 1
        %s505 = scalar_lea.sflag [#allocation4], %s504
        %s506 = sand.u32 %s55, 1
        %s507 = smul.addr %s506, 8
        %s508 = scalar_lea.vmem [#allocation3], %s507
        %p509 = pneg %p68
        %p510 = pneg %p65
        %s511 = sand.u32 %s33, 1
        %s512 = scalar_lea.sflag [#allocation7], %s511
        %s513 = sand.u32 %s81, 1
        %s514 = smul.addr %s513, 8
        %s515 = scalar_lea.vmem [#allocation6], %s514
        %p516 = pneg %p94
        %p517 = pneg %p91
        %s518 = sand.u32 %s33, 1
        %s519 = scalar_lea.sflag [#allocation7], %s518
        %s520 = sand.u32 %s107, 1
        %s521 = smul.addr %s520, 8
        %s522 = scalar_lea.vmem [#allocation8], %s521
        %p523 = pneg %p120
        %p524 = pneg %p117
        %p525 = pneg %p141
        %p526 = pneg %p138
        %p527 = pneg %p162
        %p528 = pneg %p159
        %p529 = pneg %p183
        %p530 = pneg %p180
        %p531 = pneg %p204
        %p532 = pneg %p201
        %p533 = pneg %p225
        %p534 = pneg %p222
        %p535 = pneg %p246
        %p536 = pneg %p243
        %p537 = pneg %p267
        %p538 = pneg %p264
        %p539 = pneg %p288
        %p540 = pneg %p285
        %p541 = pneg %p316
        %p542 = pneg %p313
        %s543 = sand.u32 %s303, 1
        %s544 = scalar_lea.sflag [#allocation5], %s543
        %s545 = sand.u32 %s303, 1
        %s546 = smul.addr %s545, 8
        %s547 = scalar_lea.vmem [#allocation15], %s546
        %v548 = vld [vmem:[%s465] sm:$0xff]
        %v549 = vld [vmem:[%s474] sm:$0xff]
        %v550 = vld [vmem:[%s483] sm:$0xff]
        %v551 = vld [vmem:[#allocation9] sm:$0xff]
        %v552 = vld [vmem:[#allocation9 + $0x8] sm:$0xff]
        %v553 = vld [vmem:[#allocation9 + $0x10] sm:$0xff]
        %v554 = vld [vmem:[#allocation9 + $0x18] sm:$0xff]
        %v555 = vld [vmem:[%s4] sm:$0x1]
        %v557 = vlaneseq
        %v558 = vshrl.u32 %v557, 7
        %v559 = vsub.s32 0, %v558
        %v560 = vrot.slane %v555, %v559
        %vm562 = vcmask 261120
        %v564 = vsel %vm562, %v548, 0
        %566 = vmatprep.subr.mxu0 0.0
        %567 = vmatpush1.msra.mxu0 0.0
        %568 = vmatprep.subr.mxu0 0.0
        %569 = vmatpush1.msra.mxu0 0.0
        %570 = vmatprep.subr.mxu0 0.0
        %571 = vmatpush1.msra.mxu0 0.0
        %572 = vmatprep.subr.mxu0 0.0
        %573 = vmatpush1.msra.mxu0 0.0
        %574 = vmatprep.subr.mxu0 0.0
        %575 = vmatpush1.msra.mxu0 0.0
        %576 = vmatprep.subr.mxu0 0.0
        %577 = vmatpush1.msra.mxu0 0.0
        %578 = vmatprep.subr.mxu0 0.0
        %579 = vmatpush1.msra.mxu0 0.0
        %580 = vmatprep.subr.mxu0 0.0
        %581 = vmatpush1.msra.mxu0 0.0
        %582 = vmatprep.subr.mxu0 0.0
        %583 = vmatpush1.msra.mxu0 0.0
        %584 = vmatprep.subr.mxu0 0.0
        %585 = vmatpush1.msra.mxu0 0.0
        %586 = vmatprep.subr.mxu0 0.0
        %587 = vmatpush1.msra.mxu0 0.0
        %588 = vmatprep.subr.mxu0 0.0
        %589 = vmatpush1.msra.mxu0 0.0
        %590 = vmatprep.subr.mxu0 0.0
        %591 = vmatpush1.msra.mxu0 %v554
        %592 = vmatprep.subr.mxu0 0.0
        %593 = vmatpush1.msra.mxu0 %v553
        %594 = vmatprep.subr.mxu0 0.0
        %595 = vmatpush1.msra.mxu0 %v552
        %596 = vmatprep.subr.mxu0 0.0
        %597 = vmatpush1.msra.mxu0 %v551
        %598 = vmatprep.subr.mxu0 0.0
        %599 = vmatpush2.msra.mxu0 0.0
        %600 = vmatprep.subr.mxu0 0.0
        %601 = vmatpush2.msra.mxu0 0.0
        %602 = vmatprep.subr.mxu0 0.0
        %603 = vmatpush2.msra.mxu0 0.0
        %604 = vmatprep.subr.mxu0 0.0
        %605 = vmatpush2.msra.mxu0 0.0
        %606 = vmatprep.subr.mxu0 0.0
        %607 = vmatpush2.msra.mxu0 0.0
        %608 = vmatprep.subr.mxu0 0.0
        %609 = vmatpush2.msra.mxu0 0.0
        %610 = vmatprep.subr.mxu0 0.0
        %611 = vmatpush2.msra.mxu0 0.0
        %612 = vmatprep.subr.mxu0 0.0
        %613 = vmatpush2.msra.mxu0 0.0
        %614 = vmatprep.subr.mxu0 0.0
        %615 = vmatpush2.msra.mxu0 0.0
        %616 = vmatprep.subr.mxu0 0.0
        %617 = vmatpush2.msra.mxu0 0.0
        %618 = vmatprep.subr.mxu0 0.0
        %619 = vmatpush2.msra.mxu0 0.0
        %620 = vmatprep.subr.mxu0 0.0
        %621 = vmatpush2.msra.mxu0 0.0
        %622 = vmatprep.subr.mxu0 0.0
        %623 = vmatpush2.msra.mxu0 0.0
        %624 = vmatprep.subr.mxu0 0.0
        %625 = vmatpush2.msra.mxu0 0.0
        %626 = vmatprep.subr.mxu0 0.0
        %627 = vmatpush2.msra.mxu0 0.0
        %628 = vmatprep.subr.mxu0 0.0
        %629 = vmatpush2.msra.mxu0 0.0
        %630 = vmatprep.mubr.f32.mxu0 0.0
        %631 = vmatmul.mubr.f32.gmra.mxu0 %v564
        %v632 = vpop.f32.mrf.mxu0
        %v633 = vadd.f32 %v560, %v632
        %v634 = vpop.f32.mrf.mxu0
        %635 = vdwg.mxu0
        %v636 = vld [vmem:[#allocation11] sm:$0xff]
        %v637 = vld [vmem:[#allocation11 + $0x8] sm:$0xff]
        %v638 = vld [vmem:[#allocation11 + $0x10] sm:$0xff]
        %v639 = vld [vmem:[#allocation11 + $0x18] sm:$0xff]
        %v640 = vld [vmem:[%s6] sm:$0x1]
        %v642 = vlaneseq
        %v643 = vshrl.u32 %v642, 7
        %v644 = vsub.s32 0, %v643
        %v645 = vrot.slane %v640, %v644
        %v648 = vsel %vm562, %v549, 0
        %650 = vmatprep.subr.mxu0 0.0
        %651 = vmatpush1.msra.mxu0 0.0
        %652 = vmatprep.subr.mxu0 0.0
        %653 = vmatpush1.msra.mxu0 0.0
        %654 = vmatprep.subr.mxu0 0.0
        %655 = vmatpush1.msra.mxu0 0.0
        %656 = vmatprep.subr.mxu0 0.0
        %657 = vmatpush1.msra.mxu0 0.0
        %658 = vmatprep.subr.mxu0 0.0
        %659 = vmatpush1.msra.mxu0 0.0
        %660 = vmatprep.subr.mxu0 0.0
        %661 = vmatpush1.msra.mxu0 0.0
        %662 = vmatprep.subr.mxu0 0.0
        %663 = vmatpush1.msra.mxu0 0.0
        %664 = vmatprep.subr.mxu0 0.0
        %665 = vmatpush1.msra.mxu0 0.0
        %666 = vmatprep.subr.mxu0 0.0
        %667 = vmatpush1.msra.mxu0 0.0
        %668 = vmatprep.subr.mxu0 0.0
        %669 = vmatpush1.msra.mxu0 0.0
        %670 = vmatprep.subr.mxu0 0.0
        %671 = vmatpush1.msra.mxu0 0.0
        %672 = vmatprep.subr.mxu0 0.0
        %673 = vmatpush1.msra.mxu0 0.0
        %674 = vmatprep.subr.mxu0 0.0
        %675 = vmatpush1.msra.mxu0 %v639
        %676 = vmatprep.subr.mxu0 0.0
        %677 = vmatpush1.msra.mxu0 %v638
        %678 = vmatprep.subr.mxu0 0.0
        %679 = vmatpush1.msra.mxu0 %v637
        %680 = vmatprep.subr.mxu0 0.0
        %681 = vmatpush1.msra.mxu0 %v636
        %682 = vmatprep.subr.mxu0 0.0
        %683 = vmatpush2.msra.mxu0 0.0
        %684 = vmatprep.subr.mxu0 0.0
        %685 = vmatpush2.msra.mxu0 0.0
        %686 = vmatprep.subr.mxu0 0.0
        %687 = vmatpush2.msra.mxu0 0.0
        %688 = vmatprep.subr.mxu0 0.0
        %689 = vmatpush2.msra.mxu0 0.0
        %690 = vmatprep.subr.mxu0 0.0
        %691 = vmatpush2.msra.mxu0 0.0
        %692 = vmatprep.subr.mxu0 0.0
        %693 = vmatpush2.msra.mxu0 0.0
        %694 = vmatprep.subr.mxu0 0.0
        %695 = vmatpush2.msra.mxu0 0.0
        %696 = vmatprep.subr.mxu0 0.0
        %697 = vmatpush2.msra.mxu0 0.0
        %698 = vmatprep.subr.mxu0 0.0
        %699 = vmatpush2.msra.mxu0 0.0
        %700 = vmatprep.subr.mxu0 0.0
        %701 = vmatpush2.msra.mxu0 0.0
        %702 = vmatprep.subr.mxu0 0.0
        %703 = vmatpush2.msra.mxu0 0.0
        %704 = vmatprep.subr.mxu0 0.0
        %705 = vmatpush2.msra.mxu0 0.0
        %706 = vmatprep.subr.mxu0 0.0
        %707 = vmatpush2.msra.mxu0 0.0
        %708 = vmatprep.subr.mxu0 0.0
        %709 = vmatpush2.msra.mxu0 0.0
        %710 = vmatprep.subr.mxu0 0.0
        %711 = vmatpush2.msra.mxu0 0.0
        %712 = vmatprep.subr.mxu0 0.0
        %713 = vmatpush2.msra.mxu0 0.0
        %714 = vmatprep.mubr.f32.mxu0 0.0
        %715 = vmatmul.mubr.f32.gmra.mxu0 %v648
        %v716 = vpop.f32.mrf.mxu0
        %v717 = vadd.f32 %v645, %v716
        %v718 = vpop.f32.mrf.mxu0
        %719 = vdwg.mxu0
        %v720 = vld [vmem:[#allocation12] sm:$0xff]
        %v721 = vld [vmem:[#allocation12 + $0x8] sm:$0xff]
        %v722 = vld [vmem:[#allocation12 + $0x10] sm:$0xff]
        %v723 = vld [vmem:[#allocation12 + $0x18] sm:$0xff]
        %v724 = vld [vmem:[%s8] sm:$0x1]
        %v726 = vlaneseq
        %v727 = vshrl.u32 %v726, 7
        %v728 = vsub.s32 0, %v727
        %v729 = vrot.slane %v724, %v728
        %v732 = vsel %vm562, %v550, 0
        %734 = vmatprep.subr.mxu0 0.0
        %735 = vmatpush1.msra.mxu0 0.0
        %736 = vmatprep.subr.mxu0 0.0
        %737 = vmatpush1.msra.mxu0 0.0
        %738 = vmatprep.subr.mxu0 0.0
        %739 = vmatpush1.msra.mxu0 0.0
        %740 = vmatprep.subr.mxu0 0.0
        %741 = vmatpush1.msra.mxu0 0.0
        %742 = vmatprep.subr.mxu0 0.0
        %743 = vmatpush1.msra.mxu0 0.0
        %744 = vmatprep.subr.mxu0 0.0
        %745 = vmatpush1.msra.mxu0 0.0
        %746 = vmatprep.subr.mxu0 0.0
        %747 = vmatpush1.msra.mxu0 0.0
        %748 = vmatprep.subr.mxu0 0.0
        %749 = vmatpush1.msra.mxu0 0.0
        %750 = vmatprep.subr.mxu0 0.0
        %751 = vmatpush1.msra.mxu0 0.0
        %752 = vmatprep.subr.mxu0 0.0
        %753 = vmatpush1.msra.mxu0 0.0
        %754 = vmatprep.subr.mxu0 0.0
        %755 = vmatpush1.msra.mxu0 0.0
        %756 = vmatprep.subr.mxu0 0.0
        %757 = vmatpush1.msra.mxu0 0.0
        %758 = vmatprep.subr.mxu0 0.0
        %759 = vmatpush1.msra.mxu0 %v723
        %760 = vmatprep.subr.mxu0 0.0
        %761 = vmatpush1.msra.mxu0 %v722
        %762 = vmatprep.subr.mxu0 0.0
        %763 = vmatpush1.msra.mxu0 %v721
        %764 = vmatprep.subr.mxu0 0.0
        %765 = vmatpush1.msra.mxu0 %v720
        %766 = vmatprep.subr.mxu0 0.0
        %767 = vmatpush2.msra.mxu0 0.0
        %768 = vmatprep.subr.mxu0 0.0
        %769 = vmatpush2.msra.mxu0 0.0
        %770 = vmatprep.subr.mxu0 0.0
        %771 = vmatpush2.msra.mxu0 0.0
        %772 = vmatprep.subr.mxu0 0.0
        %773 = vmatpush2.msra.mxu0 0.0
        %774 = vmatprep.subr.mxu0 0.0
        %775 = vmatpush2.msra.mxu0 0.0
        %776 = vmatprep.subr.mxu0 0.0
        %777 = vmatpush2.msra.mxu0 0.0
        %778 = vmatprep.subr.mxu0 0.0
        %779 = vmatpush2.msra.mxu0 0.0
        %780 = vmatprep.subr.mxu0 0.0
        %781 = vmatpush2.msra.mxu0 0.0
        %782 = vmatprep.subr.mxu0 0.0
        %783 = vmatpush2.msra.mxu0 0.0
        %784 = vmatprep.subr.mxu0 0.0
        %785 = vmatpush2.msra.mxu0 0.0
        %786 = vmatprep.subr.mxu0 0.0
        %787 = vmatpush2.msra.mxu0 0.0
        %788 = vmatprep.subr.mxu0 0.0
        %789 = vmatpush2.msra.mxu0 0.0
        %790 = vmatprep.subr.mxu0 0.0
        %791 = vmatpush2.msra.mxu0 0.0
        %792 = vmatprep.subr.mxu0 0.0
        %793 = vmatpush2.msra.mxu0 0.0
        %794 = vmatprep.subr.mxu0 0.0
        %795 = vmatpush2.msra.mxu0 0.0
        %796 = vmatprep.subr.mxu0 0.0
        %797 = vmatpush2.msra.mxu0 0.0
        %798 = vmatprep.mubr.f32.mxu0 0.0
        %799 = vmatmul.mubr.f32.gmra.mxu0 %v732
        %v800 = vpop.f32.mrf.mxu0
        %v801 = vadd.f32 %v729, %v800
        %v802 = vpop.f32.mrf.mxu0
        %803 = vdwg.mxu0
        %v804 = vmul.f32 %v633, 0.35355338
        %vm805 = vcmask 64512
        %v807 = vsel %vm805, %v804, 0
        %v810 = vsel %vm805, %v717, 0
        %812 = vmatprep.subr.mxu0 0.0
        %813 = vmatpush1.xpose.msra.mxu0 0.0
        %814 = vmatprep.subr.mxu0 0.0
        %815 = vmatpush1.xpose.msra.mxu0 0.0
        %816 = vmatprep.subr.mxu0 0.0
        %817 = vmatpush1.xpose.msra.mxu0 0.0
        %818 = vmatprep.subr.mxu0 0.0
        %819 = vmatpush1.xpose.msra.mxu0 0.0
        %820 = vmatprep.subr.mxu0 0.0
        %821 = vmatpush1.xpose.msra.mxu0 0.0
        %822 = vmatprep.subr.mxu0 0.0
        %823 = vmatpush1.xpose.msra.mxu0 0.0
        %824 = vmatprep.subr.mxu0 0.0
        %825 = vmatpush1.xpose.msra.mxu0 0.0
        %826 = vmatprep.subr.mxu0 0.0
        %827 = vmatpush1.xpose.msra.mxu0 0.0
        %828 = vmatprep.subr.mxu0 0.0
        %829 = vmatpush1.xpose.msra.mxu0 0.0
        %830 = vmatprep.subr.mxu0 0.0
        %831 = vmatpush1.xpose.msra.mxu0 0.0
        %832 = vmatprep.subr.mxu0 0.0
        %833 = vmatpush1.xpose.msra.mxu0 0.0
        %834 = vmatprep.subr.mxu0 0.0
        %835 = vmatpush1.xpose.msra.mxu0 0.0
        %836 = vmatprep.subr.mxu0 0.0
        %837 = vmatpush1.xpose.msra.mxu0 0.0
        %838 = vmatprep.subr.mxu0 0.0
        %839 = vmatpush1.xpose.msra.mxu0 0.0
        %840 = vmatprep.subr.mxu0 0.0
        %841 = vmatpush1.xpose.msra.mxu0 0.0
        %842 = vmatprep.subr.mxu0 0.0
        %843 = vmatpush1.xpose.msra.mxu0 %v810
        %844 = vmatprep.subr.mxu0 0.0
        %845 = vmatpush2.xpose.msra.mxu0 0.0
        %846 = vmatprep.subr.mxu0 0.0
        %847 = vmatpush2.xpose.msra.mxu0 0.0
        %848 = vmatprep.subr.mxu0 0.0
        %849 = vmatpush2.xpose.msra.mxu0 0.0
        %850 = vmatprep.subr.mxu0 0.0
        %851 = vmatpush2.xpose.msra.mxu0 0.0
        %852 = vmatprep.subr.mxu0 0.0
        %853 = vmatpush2.xpose.msra.mxu0 0.0
        %854 = vmatprep.subr.mxu0 0.0
        %855 = vmatpush2.xpose.msra.mxu0 0.0
        %856 = vmatprep.subr.mxu0 0.0
        %857 = vmatpush2.xpose.msra.mxu0 0.0
        %858 = vmatprep.subr.mxu0 0.0
        %859 = vmatpush2.xpose.msra.mxu0 0.0
        %860 = vmatprep.subr.mxu0 0.0
        %861 = vmatpush2.xpose.msra.mxu0 0.0
        %862 = vmatprep.subr.mxu0 0.0
        %863 = vmatpush2.xpose.msra.mxu0 0.0
        %864 = vmatprep.subr.mxu0 0.0
        %865 = vmatpush2.xpose.msra.mxu0 0.0
        %866 = vmatprep.subr.mxu0 0.0
        %867 = vmatpush2.xpose.msra.mxu0 0.0
        %868 = vmatprep.subr.mxu0 0.0
        %869 = vmatpush2.xpose.msra.mxu0 0.0
        %870 = vmatprep.subr.mxu0 0.0
        %871 = vmatpush2.xpose.msra.mxu0 0.0
        %872 = vmatprep.subr.mxu0 0.0
        %873 = vmatpush2.xpose.msra.mxu0 0.0
        %874 = vmatprep.subr.mxu0 0.0
        %875 = vmatpush2.xpose.msra.mxu0 0.0
        %876 = vmatprep.mubr.f32.mxu0 0.0
        %877 = vmatmul.mubr.f32.gmra.mxu0 %v807
        %v878 = vpop.f32.mrf.mxu0
        %v879 = vadd.f32 0.0, %v878
        %v880 = vpop.f32.mrf.mxu0
        %881 = vdwg.mxu0
        %v882 = vsel %vm805, %v879, -inf
        %883 = vmax.xlane.f32.xlu0 %v882
        %v884 = vpop.xlane.xlu0 %883
        %v885 = vsub.f32 %v879, %v884
        %v886 = vmul.f32 %v885, 1.442695
        %v887 = vpow.pop %v886
        %v888 = vsel %vm805, %v887, 0.0
        %889 = vadd.xlane.f32.xlu0 %v888
        %v890 = vpop.xlane.xlu0 %889
        %v891 = vrcp.pop %v890
        %v892 = vmul.f32 %v887, %v891
        %v894 = vsel %vm805, %v892, 0
        %896 = vmatprep.subr.mxu0 0.0
        %897 = vmatpush1.msra.mxu0 0.0
        %898 = vmatprep.subr.mxu0 0.0
        %899 = vmatpush1.msra.mxu0 0.0
        %900 = vmatprep.subr.mxu0 0.0
        %901 = vmatpush1.msra.mxu0 0.0
        %902 = vmatprep.subr.mxu0 0.0
        %903 = vmatpush1.msra.mxu0 0.0
        %904 = vmatprep.subr.mxu0 0.0
        %905 = vmatpush1.msra.mxu0 0.0
        %906 = vmatprep.subr.mxu0 0.0
        %907 = vmatpush1.msra.mxu0 0.0
        %908 = vmatprep.subr.mxu0 0.0
        %909 = vmatpush1.msra.mxu0 0.0
        %910 = vmatprep.subr.mxu0 0.0
        %911 = vmatpush1.msra.mxu0 0.0
        %912 = vmatprep.subr.mxu0 0.0
        %913 = vmatpush1.msra.mxu0 0.0
        %914 = vmatprep.subr.mxu0 0.0
        %915 = vmatpush1.msra.mxu0 0.0
        %916 = vmatprep.subr.mxu0 0.0
        %917 = vmatpush1.msra.mxu0 0.0
        %918 = vmatprep.subr.mxu0 0.0
        %919 = vmatpush1.msra.mxu0 0.0
        %920 = vmatprep.subr.mxu0 0.0
        %921 = vmatpush1.msra.mxu0 0.0
        %922 = vmatprep.subr.mxu0 0.0
        %923 = vmatpush1.msra.mxu0 0.0
        %924 = vmatprep.subr.mxu0 0.0
        %925 = vmatpush1.msra.mxu0 0.0
        %926 = vmatprep.subr.mxu0 0.0
        %927 = vmatpush1.msra.mxu0 %v801
        %928 = vmatprep.subr.mxu0 0.0
        %929 = vmatpush2.msra.mxu0 0.0
        %930 = vmatprep.subr.mxu0 0.0
        %931 = vmatpush2.msra.mxu0 0.0
        %932 = vmatprep.subr.mxu0 0.0
        %933 = vmatpush2.msra.mxu0 0.0
        %934 = vmatprep.subr.mxu0 0.0
        %935 = vmatpush2.msra.mxu0 0.0
        %936 = vmatprep.subr.mxu0 0.0
        %937 = vmatpush2.msra.mxu0 0.0
        %938 = vmatprep.subr.mxu0 0.0
        %939 = vmatpush2.msra.mxu0 0.0
        %940 = vmatprep.subr.mxu0 0.0
        %941 = vmatpush2.msra.mxu0 0.0
        %942 = vmatprep.subr.mxu0 0.0
        %943 = vmatpush2.msra.mxu0 0.0
        %944 = vmatprep.subr.mxu0 0.0
        %945 = vmatpush2.msra.mxu0 0.0
        %946 = vmatprep.subr.mxu0 0.0
        %947 = vmatpush2.msra.mxu0 0.0
        %948 = vmatprep.subr.mxu0 0.0
        %949 = vmatpush2.msra.mxu0 0.0
        %950 = vmatprep.subr.mxu0 0.0
        %951 = vmatpush2.msra.mxu0 0.0
        %952 = vmatprep.subr.mxu0 0.0
        %953 = vmatpush2.msra.mxu0 0.0
        %954 = vmatprep.subr.mxu0 0.0
        %955 = vmatpush2.msra.mxu0 0.0
        %956 = vmatprep.subr.mxu0 0.0
        %957 = vmatpush2.msra.mxu0 0.0
        %958 = vmatprep.subr.mxu0 0.0
        %959 = vmatpush2.msra.mxu0 0.0
        %960 = vmatprep.mubr.f32.mxu0 0.0
        %961 = vmatmul.mubr.f32.gmra.mxu0 %v894
        %v962 = vpop.f32.mrf.mxu0
        %v963 = vadd.f32 0.0, %v962
        %v964 = vpop.f32.mrf.mxu0
        %965 = vdwg.mxu0
        %966 = vst.msk [vmem:[#allocation2] sm:$0xff] %vm805, %v963
        %967 = vrot.lane.b32.xlu0 %v804, 120
        %v968 = vpop.permute.xlu0 %967
        %969 = vrot.lane.b32.xlu0 %v717, 120
        %v970 = vpop.permute.xlu0 %969
        %v971 = vsel %vm805, %v968, 0
        %v973 = vsel %vm805, %v970, 0
        %975 = vmatprep.subr.mxu0 0.0
        %976 = vmatpush1.xpose.msra.mxu0 0.0
        %977 = vmatprep.subr.mxu0 0.0
        %978 = vmatpush1.xpose.msra.mxu0 0.0
        %979 = vmatprep.subr.mxu0 0.0
        %980 = vmatpush1.xpose.msra.mxu0 0.0
        %981 = vmatprep.subr.mxu0 0.0
        %982 = vmatpush1.xpose.msra.mxu0 0.0
        %983 = vmatprep.subr.mxu0 0.0
        %984 = vmatpush1.xpose.msra.mxu0 0.0
        %985 = vmatprep.subr.mxu0 0.0
        %986 = vmatpush1.xpose.msra.mxu0 0.0
        %987 = vmatprep.subr.mxu0 0.0
        %988 = vmatpush1.xpose.msra.mxu0 0.0
        %989 = vmatprep.subr.mxu0 0.0
        %990 = vmatpush1.xpose.msra.mxu0 0.0
        %991 = vmatprep.subr.mxu0 0.0
        %992 = vmatpush1.xpose.msra.mxu0 0.0
        %993 = vmatprep.subr.mxu0 0.0
        %994 = vmatpush1.xpose.msra.mxu0 0.0
        %995 = vmatprep.subr.mxu0 0.0
        %996 = vmatpush1.xpose.msra.mxu0 0.0
        %997 = vmatprep.subr.mxu0 0.0
        %998 = vmatpush1.xpose.msra.mxu0 0.0
        %999 = vmatprep.subr.mxu0 0.0
        %1000 = vmatpush1.xpose.msra.mxu0 0.0
        %1001 = vmatprep.subr.mxu0 0.0
        %1002 = vmatpush1.xpose.msra.mxu0 0.0
        %1003 = vmatprep.subr.mxu0 0.0
        %1004 = vmatpush1.xpose.msra.mxu0 0.0
        %1005 = vmatprep.subr.mxu0 0.0
        %1006 = vmatpush1.xpose.msra.mxu0 %v973
        %1007 = vmatprep.subr.mxu0 0.0
        %1008 = vmatpush2.xpose.msra.mxu0 0.0
        %1009 = vmatprep.subr.mxu0 0.0
        %1010 = vmatpush2.xpose.msra.mxu0 0.0
        %1011 = vmatprep.subr.mxu0 0.0
        %1012 = vmatpush2.xpose.msra.mxu0 0.0
        %1013 = vmatprep.subr.mxu0 0.0
        %1014 = vmatpush2.xpose.msra.mxu0 0.0
        %1015 = vmatprep.subr.mxu0 0.0
        %1016 = vmatpush2.xpose.msra.mxu0 0.0
        %1017 = vmatprep.subr.mxu0 0.0
        %1018 = vmatpush2.xpose.msra.mxu0 0.0
        %1019 = vmatprep.subr.mxu0 0.0
        %1020 = vmatpush2.xpose.msra.mxu0 0.0
        %1021 = vmatprep.subr.mxu0 0.0
        %1022 = vmatpush2.xpose.msra.mxu0 0.0
        %1023 = vmatprep.subr.mxu0 0.0
        %1024 = vmatpush2.xpose.msra.mxu0 0.0
        %1025 = vmatprep.subr.mxu0 0.0
        %1026 = vmatpush2.xpose.msra.mxu0 0.0
        %1027 = vmatprep.subr.mxu0 0.0
        %1028 = vmatpush2.xpose.msra.mxu0 0.0
        %1029 = vmatprep.subr.mxu0 0.0
        %1030 = vmatpush2.xpose.msra.mxu0 0.0
        %1031 = vmatprep.subr.mxu0 0.0
        %1032 = vmatpush2.xpose.msra.mxu0 0.0
        %1033 = vmatprep.subr.mxu0 0.0
        %1034 = vmatpush2.xpose.msra.mxu0 0.0
        %1035 = vmatprep.subr.mxu0 0.0
        %1036 = vmatpush2.xpose.msra.mxu0 0.0
        %1037 = vmatprep.subr.mxu0 0.0
        %1038 = vmatpush2.xpose.msra.mxu0 0.0
        %1039 = vmatprep.mubr.f32.mxu0 0.0
        %1040 = vmatmul.mubr.f32.gmra.mxu0 %v971
        %v1041 = vpop.f32.mrf.mxu0
        %v1042 = vadd.f32 0.0, %v1041
        %v1043 = vpop.f32.mrf.mxu0
        %1044 = vdwg.mxu0
        %v1045 = vsel %vm805, %v1042, -inf
        %1046 = vmax.xlane.f32.xlu0 %v1045
        %v1047 = vpop.xlane.xlu0 %1046
        %v1048 = vsub.f32 %v1042, %v1047
        %v1049 = vmul.f32 %v1048, 1.442695
        %v1050 = vpow.pop %v1049
        %v1051 = vsel %vm805, %v1050, 0.0
        %1052 = vadd.xlane.f32.xlu0 %v1051
        %v1053 = vpop.xlane.xlu0 %1052
        %v1054 = vrcp.pop %v1053
        %v1055 = vmul.f32 %v1050, %v1054
        %1057 = vrot.lane.b32.xlu0 %v801, 120
        %v1058 = vpop.permute.xlu0 %1057
        %v1061 = vsel %vm805, %v1055, 0
        %1063 = vmatprep.subr.mxu0 0.0
        %1064 = vmatpush1.msra.mxu0 0.0
        %1065 = vmatprep.subr.mxu0 0.0
        %1066 = vmatpush1.msra.mxu0 0.0
        %1067 = vmatprep.subr.mxu0 0.0
        %1068 = vmatpush1.msra.mxu0 0.0
        %1069 = vmatprep.subr.mxu0 0.0
        %1070 = vmatpush1.msra.mxu0 0.0
        %1071 = vmatprep.subr.mxu0 0.0
        %1072 = vmatpush1.msra.mxu0 0.0
        %1073 = vmatprep.subr.mxu0 0.0
        %1074 = vmatpush1.msra.mxu0 0.0
        %1075 = vmatprep.subr.mxu0 0.0
        %1076 = vmatpush1.msra.mxu0 0.0
        %1077 = vmatprep.subr.mxu0 0.0
        %1078 = vmatpush1.msra.mxu0 0.0
        %1079 = vmatprep.subr.mxu0 0.0
        %1080 = vmatpush1.msra.mxu0 0.0
        %1081 = vmatprep.subr.mxu0 0.0
        %1082 = vmatpush1.msra.mxu0 0.0
        %1083 = vmatprep.subr.mxu0 0.0
        %1084 = vmatpush1.msra.mxu0 0.0
        %1085 = vmatprep.subr.mxu0 0.0
        %1086 = vmatpush1.msra.mxu0 0.0
        %1087 = vmatprep.subr.mxu0 0.0
        %1088 = vmatpush1.msra.mxu0 0.0
        %1089 = vmatprep.subr.mxu0 0.0
        %1090 = vmatpush1.msra.mxu0 0.0
        %1091 = vmatprep.subr.mxu0 0.0
        %1092 = vmatpush1.msra.mxu0 0.0
        %1093 = vmatprep.subr.mxu0 0.0
        %1094 = vmatpush1.msra.mxu0 %v1058
        %1095 = vmatprep.subr.mxu0 0.0
        %1096 = vmatpush2.msra.mxu0 0.0
        %1097 = vmatprep.subr.mxu0 0.0
        %1098 = vmatpush2.msra.mxu0 0.0
        %1099 = vmatprep.subr.mxu0 0.0
        %1100 = vmatpush2.msra.mxu0 0.0
        %1101 = vmatprep.subr.mxu0 0.0
        %1102 = vmatpush2.msra.mxu0 0.0
        %1103 = vmatprep.subr.mxu0 0.0
        %1104 = vmatpush2.msra.mxu0 0.0
        %1105 = vmatprep.subr.mxu0 0.0
        %1106 = vmatpush2.msra.mxu0 0.0
        %1107 = vmatprep.subr.mxu0 0.0
        %1108 = vmatpush2.msra.mxu0 0.0
        %1109 = vmatprep.subr.mxu0 0.0
        %1110 = vmatpush2.msra.mxu0 0.0
        %1111 = vmatprep.subr.mxu0 0.0
        %1112 = vmatpush2.msra.mxu0 0.0
        %1113 = vmatprep.subr.mxu0 0.0
        %1114 = vmatpush2.msra.mxu0 0.0
        %1115 = vmatprep.subr.mxu0 0.0
        %1116 = vmatpush2.msra.mxu0 0.0
        %1117 = vmatprep.subr.mxu0 0.0
        %1118 = vmatpush2.msra.mxu0 0.0
        %1119 = vmatprep.subr.mxu0 0.0
        %1120 = vmatpush2.msra.mxu0 0.0
        %1121 = vmatprep.subr.mxu0 0.0
        %1122 = vmatpush2.msra.mxu0 0.0
        %1123 = vmatprep.subr.mxu0 0.0
        %1124 = vmatpush2.msra.mxu0 0.0
        %1125 = vmatprep.subr.mxu0 0.0
        %1126 = vmatpush2.msra.mxu0 0.0
        %1127 = vmatprep.mubr.f32.mxu0 0.0
        %1128 = vmatmul.mubr.f32.gmra.mxu0 %v1061
        %v1129 = vpop.f32.mrf.mxu0
        %v1130 = vadd.f32 0.0, %v1129
        %v1131 = vpop.f32.mrf.mxu0
        %1132 = vdwg.mxu0
        %1134 = vrot.lane.b32.xlu0 %v1130, 8
        %v1135 = vpop.permute.xlu0 %1134
        %vm1137 = vcmask 130112
        %1138 = vst.msk [vmem:[#allocation2] sm:$0xff] %vm1137, %v1135
        %1139 = vrot.lane.b32.xlu0 %v804, 112
        %v1140 = vpop.permute.xlu0 %1139
        %1141 = vrot.lane.b32.xlu0 %v717, 112
        %v1142 = vpop.permute.xlu0 %1141
        %v1143 = vsel %vm805, %v1140, 0
        %v1145 = vsel %vm805, %v1142, 0
        %1147 = vmatprep.subr.mxu0 0.0
        %1148 = vmatpush1.xpose.msra.mxu0 0.0
        %1149 = vmatprep.subr.mxu0 0.0
        %1150 = vmatpush1.xpose.msra.mxu0 0.0
        %1151 = vmatprep.subr.mxu0 0.0
        %1152 = vmatpush1.xpose.msra.mxu0 0.0
        %1153 = vmatprep.subr.mxu0 0.0
        %1154 = vmatpush1.xpose.msra.mxu0 0.0
        %1155 = vmatprep.subr.mxu0 0.0
        %1156 = vmatpush1.xpose.msra.mxu0 0.0
        %1157 = vmatprep.subr.mxu0 0.0
        %1158 = vmatpush1.xpose.msra.mxu0 0.0
        %1159 = vmatprep.subr.mxu0 0.0
        %1160 = vmatpush1.xpose.msra.mxu0 0.0
        %1161 = vmatprep.subr.mxu0 0.0
        %1162 = vmatpush1.xpose.msra.mxu0 0.0
        %1163 = vmatprep.subr.mxu0 0.0
        %1164 = vmatpush1.xpose.msra.mxu0 0.0
        %1165 = vmatprep.subr.mxu0 0.0
        %1166 = vmatpush1.xpose.msra.mxu0 0.0
        %1167 = vmatprep.subr.mxu0 0.0
        %1168 = vmatpush1.xpose.msra.mxu0 0.0
        %1169 = vmatprep.subr.mxu0 0.0
        %1170 = vmatpush1.xpose.msra.mxu0 0.0
        %1171 = vmatprep.subr.mxu0 0.0
        %1172 = vmatpush1.xpose.msra.mxu0 0.0
        %1173 = vmatprep.subr.mxu0 0.0
        %1174 = vmatpush1.xpose.msra.mxu0 0.0
        %1175 = vmatprep.subr.mxu0 0.0
        %1176 = vmatpush1.xpose.msra.mxu0 0.0
        %1177 = vmatprep.subr.mxu0 0.0
        %1178 = vmatpush1.xpose.msra.mxu0 %v1145
        %1179 = vmatprep.subr.mxu0 0.0
        %1180 = vmatpush2.xpose.msra.mxu0 0.0
        %1181 = vmatprep.subr.mxu0 0.0
        %1182 = vmatpush2.xpose.msra.mxu0 0.0
        %1183 = vmatprep.subr.mxu0 0.0
        %1184 = vmatpush2.xpose.msra.mxu0 0.0
        %1185 = vmatprep.subr.mxu0 0.0
        %1186 = vmatpush2.xpose.msra.mxu0 0.0
        %1187 = vmatprep.subr.mxu0 0.0
        %1188 = vmatpush2.xpose.msra.mxu0 0.0
        %1189 = vmatprep.subr.mxu0 0.0
        %1190 = vmatpush2.xpose.msra.mxu0 0.0
        %1191 = vmatprep.subr.mxu0 0.0
        %1192 = vmatpush2.xpose.msra.mxu0 0.0
        %1193 = vmatprep.subr.mxu0 0.0
        %1194 = vmatpush2.xpose.msra.mxu0 0.0
        %1195 = vmatprep.subr.mxu0 0.0
        %1196 = vmatpush2.xpose.msra.mxu0 0.0
        %1197 = vmatprep.subr.mxu0 0.0
        %1198 = vmatpush2.xpose.msra.mxu0 0.0
        %1199 = vmatprep.subr.mxu0 0.0
        %1200 = vmatpush2.xpose.msra.mxu0 0.0
        %1201 = vmatprep.subr.mxu0 0.0
        %1202 = vmatpush2.xpose.msra.mxu0 0.0
        %1203 = vmatprep.subr.mxu0 0.0
        %1204 = vmatpush2.xpose.msra.mxu0 0.0
        %1205 = vmatprep.subr.mxu0 0.0
        %1206 = vmatpush2.xpose.msra.mxu0 0.0
        %1207 = vmatprep.subr.mxu0 0.0
        %1208 = vmatpush2.xpose.msra.mxu0 0.0
        %1209 = vmatprep.subr.mxu0 0.0
        %1210 = vmatpush2.xpose.msra.mxu0 0.0
        %1211 = vmatprep.mubr.f32.mxu0 0.0
        %1212 = vmatmul.mubr.f32.gmra.mxu0 %v1143
        %v1213 = vpop.f32.mrf.mxu0
        %v1214 = vadd.f32 0.0, %v1213
        %v1215 = vpop.f32.mrf.mxu0
        %1216 = vdwg.mxu0
        %v1217 = vsel %vm805, %v1214, -inf
        %1218 = vmax.xlane.f32.xlu0 %v1217
        %v1219 = vpop.xlane.xlu0 %1218
        %v1220 = vsub.f32 %v1214, %v1219
        %v1221 = vmul.f32 %v1220, 1.442695
        %v1222 = vpow.pop %v1221
        %v1223 = vsel %vm805, %v1222, 0.0
        %1224 = vadd.xlane.f32.xlu0 %v1223
        %v1225 = vpop.xlane.xlu0 %1224
        %v1226 = vrcp.pop %v1225
        %v1227 = vmul.f32 %v1222, %v1226
        %1228 = vrot.lane.b32.xlu0 %v801, 112
        %v1229 = vpop.permute.xlu0 %1228
        %v1232 = vsel %vm805, %v1227, 0
        %1234 = vmatprep.subr.mxu0 0.0
        %1235 = vmatpush1.msra.mxu0 0.0
        %1236 = vmatprep.subr.mxu0 0.0
        %1237 = vmatpush1.msra.mxu0 0.0
        %1238 = vmatprep.subr.mxu0 0.0
        %1239 = vmatpush1.msra.mxu0 0.0
        %1240 = vmatprep.subr.mxu0 0.0
        %1241 = vmatpush1.msra.mxu0 0.0
        %1242 = vmatprep.subr.mxu0 0.0
        %1243 = vmatpush1.msra.mxu0 0.0
        %1244 = vmatprep.subr.mxu0 0.0
        %1245 = vmatpush1.msra.mxu0 0.0
        %1246 = vmatprep.subr.mxu0 0.0
        %1247 = vmatpush1.msra.mxu0 0.0
        %1248 = vmatprep.subr.mxu0 0.0
        %1249 = vmatpush1.msra.mxu0 0.0
        %1250 = vmatprep.subr.mxu0 0.0
        %1251 = vmatpush1.msra.mxu0 0.0
        %1252 = vmatprep.subr.mxu0 0.0
        %1253 = vmatpush1.msra.mxu0 0.0
        %1254 = vmatprep.subr.mxu0 0.0
        %1255 = vmatpush1.msra.mxu0 0.0
        %1256 = vmatprep.subr.mxu0 0.0
        %1257 = vmatpush1.msra.mxu0 0.0
        %1258 = vmatprep.subr.mxu0 0.0
        %1259 = vmatpush1.msra.mxu0 0.0
        %1260 = vmatprep.subr.mxu0 0.0
        %1261 = vmatpush1.msra.mxu0 0.0
        %1262 = vmatprep.subr.mxu0 0.0
        %1263 = vmatpush1.msra.mxu0 0.0
        %1264 = vmatprep.subr.mxu0 0.0
        %1265 = vmatpush1.msra.mxu0 %v1229
        %1266 = vmatprep.subr.mxu0 0.0
        %1267 = vmatpush2.msra.mxu0 0.0
        %1268 = vmatprep.subr.mxu0 0.0
        %1269 = vmatpush2.msra.mxu0 0.0
        %1270 = vmatprep.subr.mxu0 0.0
        %1271 = vmatpush2.msra.mxu0 0.0
        %1272 = vmatprep.subr.mxu0 0.0
        %1273 = vmatpush2.msra.mxu0 0.0
        %1274 = vmatprep.subr.mxu0 0.0
        %1275 = vmatpush2.msra.mxu0 0.0
        %1276 = vmatprep.subr.mxu0 0.0
        %1277 = vmatpush2.msra.mxu0 0.0
        %1278 = vmatprep.subr.mxu0 0.0
        %1279 = vmatpush2.msra.mxu0 0.0
        %1280 = vmatprep.subr.mxu0 0.0
        %1281 = vmatpush2.msra.mxu0 0.0
        %1282 = vmatprep.subr.mxu0 0.0
        %1283 = vmatpush2.msra.mxu0 0.0
        %1284 = vmatprep.subr.mxu0 0.0
        %1285 = vmatpush2.msra.mxu0 0.0
        %1286 = vmatprep.subr.mxu0 0.0
        %1287 = vmatpush2.msra.mxu0 0.0
        %1288 = vmatprep.subr.mxu0 0.0
        %1289 = vmatpush2.msra.mxu0 0.0
        %1290 = vmatprep.subr.mxu0 0.0
        %1291 = vmatpush2.msra.mxu0 0.0
        %1292 = vmatprep.subr.mxu0 0.0
        %1293 = vmatpush2.msra.mxu0 0.0
        %1294 = vmatprep.subr.mxu0 0.0
        %1295 = vmatpush2.msra.mxu0 0.0
        %1296 = vmatprep.subr.mxu0 0.0
        %1297 = vmatpush2.msra.mxu0 0.0
        %1298 = vmatprep.mubr.f32.mxu0 0.0
        %1299 = vmatmul.mubr.f32.gmra.mxu0 %v1232
        %v1300 = vpop.f32.mrf.mxu0
        %v1301 = vadd.f32 0.0, %v1300
        %v1302 = vpop.f32.mrf.mxu0
        %1303 = vdwg.mxu0
        %1305 = vrot.lane.b32.xlu0 %v1301, 16
        %v1306 = vpop.permute.xlu0 %1305
        %vm1308 = vcmask 195712
        %1309 = vst.msk [vmem:[#allocation2] sm:$0xff] %vm1308, %v1306
        %1310 = vrot.lane.b32.xlu0 %v804, 104
        %v1311 = vpop.permute.xlu0 %1310
        %1312 = vrot.lane.b32.xlu0 %v717, 104
        %v1313 = vpop.permute.xlu0 %1312
        %v1314 = vsel %vm805, %v1311, 0
        %v1316 = vsel %vm805, %v1313, 0
        %1318 = vmatprep.subr.mxu0 0.0
        %1319 = vmatpush1.xpose.msra.mxu0 0.0
        %1320 = vmatprep.subr.mxu0 0.0
        %1321 = vmatpush1.xpose.msra.mxu0 0.0
        %1322 = vmatprep.subr.mxu0 0.0
        %1323 = vmatpush1.xpose.msra.mxu0 0.0
        %1324 = vmatprep.subr.mxu0 0.0
        %1325 = vmatpush1.xpose.msra.mxu0 0.0
        %1326 = vmatprep.subr.mxu0 0.0
        %1327 = vmatpush1.xpose.msra.mxu0 0.0
        %1328 = vmatprep.subr.mxu0 0.0
        %1329 = vmatpush1.xpose.msra.mxu0 0.0
        %1330 = vmatprep.subr.mxu0 0.0
        %1331 = vmatpush1.xpose.msra.mxu0 0.0
        %1332 = vmatprep.subr.mxu0 0.0
        %1333 = vmatpush1.xpose.msra.mxu0 0.0
        %1334 = vmatprep.subr.mxu0 0.0
        %1335 = vmatpush1.xpose.msra.mxu0 0.0
        %1336 = vmatprep.subr.mxu0 0.0
        %1337 = vmatpush1.xpose.msra.mxu0 0.0
        %1338 = vmatprep.subr.mxu0 0.0
        %1339 = vmatpush1.xpose.msra.mxu0 0.0
        %1340 = vmatprep.subr.mxu0 0.0
        %1341 = vmatpush1.xpose.msra.mxu0 0.0
        %1342 = vmatprep.subr.mxu0 0.0
        %1343 = vmatpush1.xpose.msra.mxu0 0.0
        %1344 = vmatprep.subr.mxu0 0.0
        %1345 = vmatpush1.xpose.msra.mxu0 0.0
        %1346 = vmatprep.subr.mxu0 0.0
        %1347 = vmatpush1.xpose.msra.mxu0 0.0
        %1348 = vmatprep.subr.mxu0 0.0
        %1349 = vmatpush1.xpose.msra.mxu0 %v1316
        %1350 = vmatprep.subr.mxu0 0.0
        %1351 = vmatpush2.xpose.msra.mxu0 0.0
        %1352 = vmatprep.subr.mxu0 0.0
        %1353 = vmatpush2.xpose.msra.mxu0 0.0
        %1354 = vmatprep.subr.mxu0 0.0
        %1355 = vmatpush2.xpose.msra.mxu0 0.0
        %1356 = vmatprep.subr.mxu0 0.0
        %1357 = vmatpush2.xpose.msra.mxu0 0.0
        %1358 = vmatprep.subr.mxu0 0.0
        %1359 = vmatpush2.xpose.msra.mxu0 0.0
        %1360 = vmatprep.subr.mxu0 0.0
        %1361 = vmatpush2.xpose.msra.mxu0 0.0
        %1362 = vmatprep.subr.mxu0 0.0
        %1363 = vmatpush2.xpose.msra.mxu0 0.0
        %1364 = vmatprep.subr.mxu0 0.0
        %1365 = vmatpush2.xpose.msra.mxu0 0.0
        %1366 = vmatprep.subr.mxu0 0.0
        %1367 = vmatpush2.xpose.msra.mxu0 0.0
        %1368 = vmatprep.subr.mxu0 0.0
        %1369 = vmatpush2.xpose.msra.mxu0 0.0
        %1370 = vmatprep.subr.mxu0 0.0
        %1371 = vmatpush2.xpose.msra.mxu0 0.0
        %1372 = vmatprep.subr.mxu0 0.0
        %1373 = vmatpush2.xpose.msra.mxu0 0.0
        %1374 = vmatprep.subr.mxu0 0.0
        %1375 = vmatpush2.xpose.msra.mxu0 0.0
        %1376 = vmatprep.subr.mxu0 0.0
        %1377 = vmatpush2.xpose.msra.mxu0 0.0
        %1378 = vmatprep.subr.mxu0 0.0
        %1379 = vmatpush2.xpose.msra.mxu0 0.0
        %1380 = vmatprep.subr.mxu0 0.0
        %1381 = vmatpush2.xpose.msra.mxu0 0.0
        %1382 = vmatprep.mubr.f32.mxu0 0.0
        %1383 = vmatmul.mubr.f32.gmra.mxu0 %v1314
        %v1384 = vpop.f32.mrf.mxu0
        %v1385 = vadd.f32 0.0, %v1384
        %v1386 = vpop.f32.mrf.mxu0
        %1387 = vdwg.mxu0
        %v1388 = vsel %vm805, %v1385, -inf
        %1389 = vmax.xlane.f32.xlu0 %v1388
        %v1390 = vpop.xlane.xlu0 %1389
        %v1391 = vsub.f32 %v1385, %v1390
        %v1392 = vmul.f32 %v1391, 1.442695
        %v1393 = vpow.pop %v1392
        %v1394 = vsel %vm805, %v1393, 0.0
        %1395 = vadd.xlane.f32.xlu0 %v1394
        %v1396 = vpop.xlane.xlu0 %1395
        %v1397 = vrcp.pop %v1396
        %v1398 = vmul.f32 %v1393, %v1397
        %1399 = vrot.lane.b32.xlu0 %v801, 104
        %v1400 = vpop.permute.xlu0 %1399
        %v1403 = vsel %vm805, %v1398, 0
        %1405 = vmatprep.subr.mxu0 0.0
        %1406 = vmatpush1.msra.mxu0 0.0
        %1407 = vmatprep.subr.mxu0 0.0
        %1408 = vmatpush1.msra.mxu0 0.0
        %1409 = vmatprep.subr.mxu0 0.0
        %1410 = vmatpush1.msra.mxu0 0.0
        %1411 = vmatprep.subr.mxu0 0.0
        %1412 = vmatpush1.msra.mxu0 0.0
        %1413 = vmatprep.subr.mxu0 0.0
        %1414 = vmatpush1.msra.mxu0 0.0
        %1415 = vmatprep.subr.mxu0 0.0
        %1416 = vmatpush1.msra.mxu0 0.0
        %1417 = vmatprep.subr.mxu0 0.0
        %1418 = vmatpush1.msra.mxu0 0.0
        %1419 = vmatprep.subr.mxu0 0.0
        %1420 = vmatpush1.msra.mxu0 0.0
        %1421 = vmatprep.subr.mxu0 0.0
        %1422 = vmatpush1.msra.mxu0 0.0
        %1423 = vmatprep.subr.mxu0 0.0
        %1424 = vmatpush1.msra.mxu0 0.0
        %1425 = vmatprep.subr.mxu0 0.0
        %1426 = vmatpush1.msra.mxu0 0.0
        %1427 = vmatprep.subr.mxu0 0.0
        %1428 = vmatpush1.msra.mxu0 0.0
        %1429 = vmatprep.subr.mxu0 0.0
        %1430 = vmatpush1.msra.mxu0 0.0
        %1431 = vmatprep.subr.mxu0 0.0
        %1432 = vmatpush1.msra.mxu0 0.0
        %1433 = vmatprep.subr.mxu0 0.0
        %1434 = vmatpush1.msra.mxu0 0.0
        %1435 = vmatprep.subr.mxu0 0.0
        %1436 = vmatpush1.msra.mxu0 %v1400
        %1437 = vmatprep.subr.mxu0 0.0
        %1438 = vmatpush2.msra.mxu0 0.0
        %1439 = vmatprep.subr.mxu0 0.0
        %1440 = vmatpush2.msra.mxu0 0.0
        %1441 = vmatprep.subr.mxu0 0.0
        %1442 = vmatpush2.msra.mxu0 0.0
        %1443 = vmatprep.subr.mxu0 0.0
        %1444 = vmatpush2.msra.mxu0 0.0
        %1445 = vmatprep.subr.mxu0 0.0
        %1446 = vmatpush2.msra.mxu0 0.0
        %1447 = vmatprep.subr.mxu0 0.0
        %1448 = vmatpush2.msra.mxu0 0.0
        %1449 = vmatprep.subr.mxu0 0.0
        %1450 = vmatpush2.msra.mxu0 0.0
        %1451 = vmatprep.subr.mxu0 0.0
        %1452 = vmatpush2.msra.mxu0 0.0
        %1453 = vmatprep.subr.mxu0 0.0
        %1454 = vmatpush2.msra.mxu0 0.0
        %1455 = vmatprep.subr.mxu0 0.0
        %1456 = vmatpush2.msra.mxu0 0.0
        %1457 = vmatprep.subr.mxu0 0.0
        %1458 = vmatpush2.msra.mxu0 0.0
        %1459 = vmatprep.subr.mxu0 0.0
        %1460 = vmatpush2.msra.mxu0 0.0
        %1461 = vmatprep.subr.mxu0 0.0
        %1462 = vmatpush2.msra.mxu0 0.0
        %1463 = vmatprep.subr.mxu0 0.0
        %1464 = vmatpush2.msra.mxu0 0.0
        %1465 = vmatprep.subr.mxu0 0.0
        %1466 = vmatpush2.msra.mxu0 0.0
        %1467 = vmatprep.subr.mxu0 0.0
        %1468 = vmatpush2.msra.mxu0 0.0
        %1469 = vmatprep.mubr.f32.mxu0 0.0
        %1470 = vmatmul.mubr.f32.gmra.mxu0 %v1403
        %v1471 = vpop.f32.mrf.mxu0
        %v1472 = vadd.f32 0.0, %v1471
        %v1473 = vpop.f32.mrf.mxu0
        %1474 = vdwg.mxu0
        %1476 = vrot.lane.b32.xlu0 %v1472, 24
        %v1477 = vpop.permute.xlu0 %1476
        %vm1479 = vcmask 261312
        %1480 = vst.msk [vmem:[#allocation2] sm:$0xff] %vm1479, %v1477
        %v1481 = vld [vmem:[#allocation2] sm:$0xff]
        %v1482 = vld [vmem:[#allocation14] sm:$0xff]
        %v1483 = vld [vmem:[#allocation14 + $0x8] sm:$0xff]
        %v1484 = vld [vmem:[#allocation14 + $0x10] sm:$0xff]
        %v1485 = vld [vmem:[#allocation14 + $0x18] sm:$0xff]
        %v1486 = vld [vmem:[%s10] sm:$0x1]
        %v1488 = vlaneseq
        %v1489 = vshrl.u32 %v1488, 7
        %v1490 = vsub.s32 0, %v1489
        %v1491 = vrot.slane %v1486, %v1490
        %v1494 = vsel %vm562, %v1481, 0
        %1496 = vmatprep.subr.mxu0 0.0
        %1497 = vmatpush1.msra.mxu0 0.0
        %1498 = vmatprep.subr.mxu0 0.0
        %1499 = vmatpush1.msra.mxu0 0.0
        %1500 = vmatprep.subr.mxu0 0.0
        %1501 = vmatpush1.msra.mxu0 0.0
        %1502 = vmatprep.subr.mxu0 0.0
        %1503 = vmatpush1.msra.mxu0 0.0
        %1504 = vmatprep.subr.mxu0 0.0
        %1505 = vmatpush1.msra.mxu0 0.0
        %1506 = vmatprep.subr.mxu0 0.0
        %1507 = vmatpush1.msra.mxu0 0.0
        %1508 = vmatprep.subr.mxu0 0.0
        %1509 = vmatpush1.msra.mxu0 0.0
        %1510 = vmatprep.subr.mxu0 0.0
        %1511 = vmatpush1.msra.mxu0 0.0
        %1512 = vmatprep.subr.mxu0 0.0
        %1513 = vmatpush1.msra.mxu0 0.0
        %1514 = vmatprep.subr.mxu0 0.0
        %1515 = vmatpush1.msra.mxu0 0.0
        %1516 = vmatprep.subr.mxu0 0.0
        %1517 = vmatpush1.msra.mxu0 0.0
        %1518 = vmatprep.subr.mxu0 0.0
        %1519 = vmatpush1.msra.mxu0 0.0
        %1520 = vmatprep.subr.mxu0 0.0
        %1521 = vmatpush1.msra.mxu0 %v1485
        %1522 = vmatprep.subr.mxu0 0.0
        %1523 = vmatpush1.msra.mxu0 %v1484
        %1524 = vmatprep.subr.mxu0 0.0
        %1525 = vmatpush1.msra.mxu0 %v1483
        %1526 = vmatprep.subr.mxu0 0.0
        %1527 = vmatpush1.msra.mxu0 %v1482
        %1528 = vmatprep.subr.mxu0 0.0
        %1529 = vmatpush2.msra.mxu0 0.0
        %1530 = vmatprep.subr.mxu0 0.0
        %1531 = vmatpush2.msra.mxu0 0.0
        %1532 = vmatprep.subr.mxu0 0.0
        %1533 = vmatpush2.msra.mxu0 0.0
        %1534 = vmatprep.subr.mxu0 0.0
        %1535 = vmatpush2.msra.mxu0 0.0
        %1536 = vmatprep.subr.mxu0 0.0
        %1537 = vmatpush2.msra.mxu0 0.0
        %1538 = vmatprep.subr.mxu0 0.0
        %1539 = vmatpush2.msra.mxu0 0.0
        %1540 = vmatprep.subr.mxu0 0.0
        %1541 = vmatpush2.msra.mxu0 0.0
        %1542 = vmatprep.subr.mxu0 0.0
        %1543 = vmatpush2.msra.mxu0 0.0
        %1544 = vmatprep.subr.mxu0 0.0
        %1545 = vmatpush2.msra.mxu0 0.0
        %1546 = vmatprep.subr.mxu0 0.0
        %1547 = vmatpush2.msra.mxu0 0.0
        %1548 = vmatprep.subr.mxu0 0.0
        %1549 = vmatpush2.msra.mxu0 0.0
        %1550 = vmatprep.subr.mxu0 0.0
        %1551 = vmatpush2.msra.mxu0 0.0
        %1552 = vmatprep.subr.mxu0 0.0
        %1553 = vmatpush2.msra.mxu0 0.0
        %1554 = vmatprep.subr.mxu0 0.0
        %1555 = vmatpush2.msra.mxu0 0.0
        %1556 = vmatprep.subr.mxu0 0.0
        %1557 = vmatpush2.msra.mxu0 0.0
        %1558 = vmatprep.subr.mxu0 0.0
        %1559 = vmatpush2.msra.mxu0 0.0
        %1560 = vmatprep.mubr.f32.mxu0 0.0
        %1561 = vmatmul.mubr.f32.gmra.mxu0 %v1494
        %v1562 = vpop.f32.mrf.mxu0
        %v1563 = vadd.f32 %v1491, %v1562
        %v1564 = vpop.f32.mrf.mxu0
        %1565 = vdwg.mxu0
        %1566 = vst.msk [vmem:[%s547] sm:$0xff] %vm562, %v1563
        %s1567 = sand.u32 %s303, 1
        %s1568 = scalar_lea.sflag [#allocation5], %s1567
        %s1569 = sand.u32 %s303, 1
        %s1570 = smul.addr %s1569, 8
        %s1571 = scalar_lea.vmem [#allocation15], %s1570
        // Predicated region
        $region93: #{tpu_custom_call.1} parent=63 // pred_check
          %p1572 = pneg %p313
        $region94: #{tpu_custom_call.1} parent=63 // pred_check_branch
          %1574 = sbr.rel (%p1572) target = $region96
        $region95: #{tpu_custom_call.1} parent=63 // pred_region
          %s1576 = ssub.s32 128, 128
          %1577 = vsyncadd %s1568, %s1576
          %s1578 = sadd.s32 %s38, %s37
          %s1579 = smul.addr %s1578, 128
          %s1580 = scalar_lea.hbm %s11, %s1579
          %s1582 = sshll.u32 %s1571, 4
          %s1583 = int_to_ptr.vmem [resolvable:$true] %s1582
          %1585 = dma.vmem_to_hbm [thread:$0]  %s1583, 128, %s1580, %s1568
        $region96: #{tpu_custom_call.1} parent=63 // pred_fallthru
          _
      $region64: #{tpu_custom_call.1} parent=5 // pred_fallthru
        _
      %p1586 = scmp.le.s32.totalorder 2, %s28
      // Predicated region
      $region97: #{tpu_custom_call.1} parent=5 // pred_check
        %p1587 = pneg %p1586
      $region98: #{tpu_custom_call.1} parent=5 // pred_check_branch
        %1589 = sbr.rel (%p1587) target = $region100
      $region99: #{tpu_custom_call.1} parent=5 // pred_region
        %s1590 = ssub.s32 %s28, 2
        // Predicated region
        $region101: #{tpu_custom_call.1} parent=99 // pred_check
          %p1591 = pneg %p319
        $region102: #{tpu_custom_call.1} parent=99 // pred_check_branch
          %1593 = sbr.rel (%p1591) target = $region104
        $region103: #{tpu_custom_call.1} parent=99 // pred_region
          %s1594 = sand.u32 %s304, 1
          %s1595 = scalar_lea.sflag [#allocation5], %s1594
          %s1596 = sand.u32 %s304, 1
          %s1597 = smul.addr %s1596, 8
          %s1598 = scalar_lea.vmem [#allocation15], %s1597
          %1599 = dma.done %s1595, 128
        $region104: #{tpu_custom_call.1} parent=99 // pred_fallthru
          _
      $region100: #{tpu_custom_call.1} parent=5 // pred_fallthru
        _
    $region6: #{tpu_custom_call.1} parent=1 // loop_footer
      %s32 = sadd.s32 1, %s28
    $region7: #{tpu_custom_call.1} parent=1 // loop_footer_branch
      %27 = sbr.rel target = $region3
    $region8: #{tpu_custom_call.1} parent=1 // loop_exit
      _
    %1600 = vsyncpa [#allocation4], 1
    %s1601 = scalar_lea.sflag [#allocation4], 1
    %1602 = vsyncpa %s1601, 1
    %1603 = vsyncpa [#allocation7], 1
    %s1604 = scalar_lea.sflag [#allocation7], 1
    %1605 = vsyncpa %s1604, 1
    %1606 = vsyncpa [#allocation10], 1
    %1607 = vsyncpa [#allocation13], 1
    %1608 = vsyncpa [#allocation5], 1
    %s1609 = scalar_lea.sflag [#allocation5], 1
    %1610 = vsyncpa %s1609, 1

</llo_original>
